<compile_context>
chip_gen: v7x
topology: tpu7x:2x2x1
jax: 0.10.0
libtpu: 0.0.40
codegen_flags: <defaults>
</compile_context>

<pallas_src>
import jax
import jax.numpy as jnp
from jax.experimental import pallas as pl
from jax.experimental.pallas import tpu as pltpu


def _round_up(x, m):
    return ((x + m - 1) // m) * m


# ----------------------------------------------------------------------------
# Fused kernel: fc stem + gated attention scorer for one (TILE_N, L0) row tile.
# ----------------------------------------------------------------------------
def _clam_attn_kernel(x_ref, w0_ref, b0_ref, wa_ref, ba_ref, wb_ref, bb_ref,
                      wc_ref, bc_ref, h_ref, s_ref):
    # fc stem: ReLU(x @ W0 + b0).  MXU matmul in the storage dtype (bf16 by
    # default) with f32 accumulation; bias / activation math in f32.
    h = jnp.dot(x_ref[...], w0_ref[...], preferred_element_type=jnp.float32)
    h = jnp.maximum(h + b0_ref[...], 0.0)
    h_ref[...] = h.astype(h_ref.dtype)

    hm = h.astype(wa_ref.dtype)  # back to the MXU dtype for the gated branch
    za = jnp.dot(hm, wa_ref[...], preferred_element_type=jnp.float32) + ba_ref[...]
    zb = jnp.dot(hm, wb_ref[...], preferred_element_type=jnp.float32) + bb_ref[...]
    a = jnp.tanh(za)                       # EUP
    g = 1.0 / (1.0 + jnp.exp(-zb))         # sigmoid (EUP exp + VPU)
    gated = (a * g).astype(wc_ref.dtype)

    s = jnp.dot(gated, wc_ref[...], preferred_element_type=jnp.float32) + bc_ref[...]
    s_ref[...] = s.astype(s_ref.dtype)     # scores stay f32


# ----------------------------------------------------------------------------
# Pallas wrapper for the per-instance hot path.
# ----------------------------------------------------------------------------
def clam_attention_scores(x, params, *, matmul_dtype=jnp.bfloat16, tile_n=None,
                          vmem_limit_bytes=32 * 1024 * 1024):
    """Returns (h: (N, L1) in matmul_dtype, raw attention scores: (N, 1) f32)."""
    N, L0 = x.shape
    L1 = params["w0"].shape[1]
    L2 = params["wa"].shape[1]
    md = jnp.dtype(matmul_dtype)
    mb = md.itemsize

    # Row tile: double-buffered x-in + h-out (+ tiny score) must fit a VMEM
    # budget that is safe on every generation (v5e's 16 MiB scoped default,
    # v7x's 64 MiB physical).  ~12 MiB of streaming buffers + <1 MiB weights.
    if tile_n is None:
        budget = 12 * 1024 * 1024
        per_row = 2 * (L0 * mb + L1 * mb + 4)     # 2x for double buffering
        tile_n = max(16, min(4096, (budget // per_row) // 16 * 16))
    tile_n = int(min(_round_up(int(tile_n), 16), _round_up(N, 16)))
    n_pad = _round_up(N, tile_n)
    n_tiles = n_pad // tile_n

    # Tail handling: zero-pad the bag to a whole number of tiles; padded rows
    # are sliced off before the softmax in the caller.
    x_p = x if n_pad == N else jnp.pad(x, ((0, n_pad - N), (0, 0)))
    x_p = x_p.astype(md)

    w0 = params["w0"].astype(md)
    wa = params["wa"].astype(md)
    wb = params["wb"].astype(md)
    wc = params["wc"].astype(md)
    b0 = params["b0"].reshape(1, L1).astype(jnp.float32)
    ba = params["ba"].reshape(1, L2).astype(jnp.float32)
    bb = params["bb"].reshape(1, L2).astype(jnp.float32)
    bc = params["bc"].reshape(1, 1).astype(jnp.float32)

    const = lambda i: (0, 0)   # weights / biases: resident in VMEM across grid
    row = lambda i: (i, 0)     # x / h / scores: streamed over N

    weight_bytes = (L0 * L1 + 2 * L1 * L2 + L2) * mb + (L1 + 2 * L2 + 1) * 4
    cost = pl.CostEstimate(
        flops=2 * n_pad * (L0 * L1 + 2 * L1 * L2 + L2),
        transcendentals=2 * n_pad * L2,                       # tanh + sigmoid
        bytes_accessed=n_pad * L0 * mb + weight_bytes + n_pad * L1 * mb + n_pad * 4,
    )

    h, scores = pl.pallas_call(
        _clam_attn_kernel,
        out_shape=(
            jax.ShapeDtypeStruct((n_pad, L1), md),            # fc features h
            jax.ShapeDtypeStruct((n_pad, 1), jnp.float32),    # raw attn logits
        ),
        grid_spec=pltpu.PrefetchScalarGridSpec(
            num_scalar_prefetch=0,
            grid=(n_tiles,),
            in_specs=[
                pl.BlockSpec((tile_n, L0), row),
                pl.BlockSpec((L0, L1), const),
                pl.BlockSpec((1, L1), const),
                pl.BlockSpec((L1, L2), const),
                pl.BlockSpec((1, L2), const),
                pl.BlockSpec((L1, L2), const),
                pl.BlockSpec((1, L2), const),
                pl.BlockSpec((L2, 1), const),
                pl.BlockSpec((1, 1), const),
            ],
            out_specs=[
                pl.BlockSpec((tile_n, L1), row),
                pl.BlockSpec((tile_n, 1), row),
            ],
        ),
        compiler_params=pltpu.CompilerParams(
            dimension_semantics=("parallel",),   # shard row tiles across TCs (v7x)
            vmem_limit_bytes=vmem_limit_bytes,
        ),
        cost_estimate=cost,
    )(x_p, w0, b0, wa, ba, wb, bb, wc, bc)

    return h[:N], scores[:N]


# ----------------------------------------------------------------------------
# Full CLAM_SB_LNL forward (inference, instance_eval=False).
# ----------------------------------------------------------------------------
def clam_sb_lnl_forward(x, params, *, matmul_dtype=jnp.bfloat16, tile_n=None):
    """Equivalent of CLAM_SB_LNL.forward([x], label, instance_eval=False).
    Returns (logits (1, n_classes), A (1, N), M (1, L1), results_dict)."""
    h, scores = clam_attention_scores(x, params, matmul_dtype=matmul_dtype,
                                      tile_n=tile_n)
    hp = jax.lax.Precision.HIGHEST
    # Bag-level aggregation is O(N*L1) — negligible vs the kernel; plain JAX.
    A = jax.nn.softmax(scores[:, 0].astype(jnp.float32))[None, :]      # (1, N)
    M = jnp.dot(A, h.astype(jnp.float32), precision=hp)                # (1, L1)
    logits = jnp.dot(M, params["wcls"], precision=hp) + params["bcls"]
    # TODO(synk): instance_eval branch (top-k patch sampling + SmoothTop1SVM
    # instance loss) is training-only, data-dependent host logic — not ported.
    return logits, A, M, {}


# ----------------------------------------------------------------------------
# Pure-JAX reference and deterministic init.
# ----------------------------------------------------------------------------
def clam_sb_lnl_ref(x, params):
    hp = jax.lax.Precision.HIGHEST
    h = jnp.maximum(jnp.dot(x, params["w0"], precision=hp) + params["b0"], 0.0)
    a = jnp.tanh(jnp.dot(h, params["wa"], precision=hp) + params["ba"])
    g = jax.nn.sigmoid(jnp.dot(h, params["wb"], precision=hp) + params["bb"])
    s = jnp.dot(a * g, params["wc"], precision=hp) + params["bc"]      # (N, 1)
    A = jax.nn.softmax(s[:, 0])[None, :]                               # (1, N)
    M = jnp.dot(A, h, precision=hp)                                    # (1, L1)
    logits = jnp.dot(M, params["wcls"], precision=hp) + params["bcls"]
    return logits, A, M


def init_params(key, size, n_classes, dtype=jnp.float32):
    """Xavier-normal weights (like initialize_weights); small non-zero biases so
    the kernel's bias-add path is exercised (torch init zeroes them)."""
    L0, L1, L2 = size
    ks = jax.random.split(key, 10)

    def xavier(k, fan_in, fan_out):
        std = (2.0 / (fan_in + fan_out)) ** 0.5
        return std * jax.random.normal(k, (fan_in, fan_out), dtype)

    return dict(
        w0=xavier(ks[0], L0, L1), b0=0.05 * jax.random.normal(ks[1], (L1,), dtype),
        wa=xavier(ks[2], L1, L2), ba=0.05 * jax.random.normal(ks[3], (L2,), dtype),
        wb=xavier(ks[4], L1, L2), bb=0.05 * jax.random.normal(ks[5], (L2,), dtype),
        wc=xavier(ks[6], L2, 1),  bc=0.05 * jax.random.normal(ks[7], (1,), dtype),
        wcls=xavier(ks[8], L1, n_classes), bcls=jnp.zeros((n_classes,), dtype),
    )


if __name__ == "__main__":
    # Small bag: N=200 patch features of dim 384 (module default size array).
    N = 200
    size = [384, 256, 128]
    n_classes = 2

    key = jax.random.PRNGKey(0)
    kx, kp = jax.random.split(key)
    x = jax.random.normal(kx, (N, size[0]), dtype=jnp.float32)
    params = init_params(kp, size, n_classes)

    logits_ref, A_ref, M_ref = clam_sb_lnl_ref(x, params)

    # f32 matmul path with an explicit small tile (exercises grid + tail pad).
    logits32, A32, M32, _ = clam_sb_lnl_forward(
        x, params, matmul_dtype=jnp.float32, tile_n=64)
    jax.block_until_ready((logits32, A32, M32))
    assert logits32.shape == (1, n_classes)
    assert A32.shape == (1, N)
    assert M32.shape == (1, size[1])
    assert jnp.allclose(A32, A_ref, atol=2e-2, rtol=2e-2)
    assert jnp.allclose(M32, M_ref, atol=2e-2, rtol=2e-2)
    assert jnp.allclose(logits32, logits_ref, atol=2e-2, rtol=2e-2)

    # Default bf16-matmul / f32-accumulation path (production configuration).
    logits16, A16, M16, _ = clam_sb_lnl_forward(x, params)
    jax.block_until_ready((logits16, A16, M16))
    assert jnp.allclose(A16, A_ref, atol=5e-2, rtol=5e-2)
    assert jnp.allclose(M16, M_ref, atol=5e-2, rtol=5e-2)
    assert jnp.allclose(logits16, logits_ref, atol=5e-2, rtol=5e-2)

    print("KERNEL_OK")
</pallas_src>

<mosaic_0001>
module attributes {stable_mosaic.version = 11 : i64} {
  func.func @_clam_attn_kernel(%arg0: i32, %arg1: memref<64x384xf32, #tpu.memory_space<vmem>>, %arg2: memref<384x256xf32, #tpu.memory_space<vmem>>, %arg3: memref<1x256xf32, #tpu.memory_space<vmem>>, %arg4: memref<256x128xf32, #tpu.memory_space<vmem>>, %arg5: memref<1x128xf32, #tpu.memory_space<vmem>>, %arg6: memref<256x128xf32, #tpu.memory_space<vmem>>, %arg7: memref<1x128xf32, #tpu.memory_space<vmem>>, %arg8: memref<128x1xf32, #tpu.memory_space<vmem>>, %arg9: memref<1x1xf32, #tpu.memory_space<vmem>>, %arg10: memref<64x256xf32, #tpu.memory_space<vmem>>, %arg11: memref<64x1xf32, #tpu.memory_space<vmem>>) attributes {dimension_semantics = [#tpu.dimension_semantics<parallel>], iteration_bounds = array<i64: 4>, scalar_prefetch = 0 : i64, scratch_operands = 0 : i64, tpu.core_type = #tpu.core_type<tc>, window_params = [{transform_indices = @transform_0, window_bounds = array<i64: 64, 384>}, {pipeline_mode = #tpu.pipeline_mode<synchronous>, transform_indices = @transform_1, window_bounds = array<i64: 384, 256>}, {pipeline_mode = #tpu.pipeline_mode<synchronous>, transform_indices = @transform_2, window_bounds = array<i64: 1, 256>}, {pipeline_mode = #tpu.pipeline_mode<synchronous>, transform_indices = @transform_3, window_bounds = array<i64: 256, 128>}, {pipeline_mode = #tpu.pipeline_mode<synchronous>, transform_indices = @transform_4, window_bounds = array<i64: 1, 128>}, {pipeline_mode = #tpu.pipeline_mode<synchronous>, transform_indices = @transform_5, window_bounds = array<i64: 256, 128>}, {pipeline_mode = #tpu.pipeline_mode<synchronous>, transform_indices = @transform_6, window_bounds = array<i64: 1, 128>}, {pipeline_mode = #tpu.pipeline_mode<synchronous>, transform_indices = @transform_7, window_bounds = array<i64: 128, 1>}, {pipeline_mode = #tpu.pipeline_mode<synchronous>, transform_indices = @transform_8, window_bounds = array<i64: 1, 1>}, {transform_indices = @transform_9, window_bounds = array<i64: 64, 256>}, {transform_indices = @transform_10, window_bounds = array<i64: 64, 1>}]} {
    %c0 = arith.constant 0 : index
    %c0_0 = arith.constant 0 : index
    %0 = vector.load %arg1[%c0, %c0_0] : memref<64x384xf32, #tpu.memory_space<vmem>>, vector<64x384xf32>
    %c0_1 = arith.constant 0 : index
    %c0_2 = arith.constant 0 : index
    %1 = vector.load %arg2[%c0_1, %c0_2] : memref<384x256xf32, #tpu.memory_space<vmem>>, vector<384x256xf32>
    %cst = arith.constant dense<0.000000e+00> : vector<64x256xf32>
    %2 = tpu.matmul %0, %1, %cst {dimension_numbers = #tpu.dot_dimension_numbers<[1], [0], [0], [1], [0, 0, 1, 1], [], []>} : vector<64x384xf32>, vector<384x256xf32>, vector<64x256xf32> -> vector<64x256xf32>
    %c0_3 = arith.constant 0 : index
    %c0_4 = arith.constant 0 : index
    %3 = vector.load %arg3[%c0_3, %c0_4] : memref<1x256xf32, #tpu.memory_space<vmem>>, vector<1x256xf32>
    %4 = vector.broadcast %3 : vector<1x256xf32> to vector<64x256xf32>
    %5 = arith.addf %2, %4 : vector<64x256xf32>
    %cst_5 = arith.constant 0.000000e+00 : f32
    %6 = vector.broadcast %cst_5 : f32 to vector<64x256xf32>
    %7 = arith.maximumf %5, %6 : vector<64x256xf32>
    %c0_6 = arith.constant 0 : index
    %c0_7 = arith.constant 0 : index
    %8 = vector.load %arg10[%c0_6, %c0_7] : memref<64x256xf32, #tpu.memory_space<vmem>>, vector<64x256xf32>
    tpu.vector_store %arg10[%c0_6, %c0_7], %7 {strides = array<i32>} : memref<64x256xf32, #tpu.memory_space<vmem>>, vector<64x256xf32>,
    %c0_8 = arith.constant 0 : index
    %c0_9 = arith.constant 0 : index
    %9 = vector.load %arg4[%c0_8, %c0_9] : memref<256x128xf32, #tpu.memory_space<vmem>>, vector<256x128xf32>
    %cst_10 = arith.constant dense<0.000000e+00> : vector<64x128xf32>
    %10 = tpu.matmul %7, %9, %cst_10 {dimension_numbers = #tpu.dot_dimension_numbers<[1], [0], [0], [1], [0, 0, 1, 1], [], []>} : vector<64x256xf32>, vector<256x128xf32>, vector<64x128xf32> -> vector<64x128xf32>
    %c0_11 = arith.constant 0 : index
    %c0_12 = arith.constant 0 : index
    %11 = vector.load %arg5[%c0_11, %c0_12] : memref<1x128xf32, #tpu.memory_space<vmem>>, vector<1x128xf32>
    %12 = vector.broadcast %11 : vector<1x128xf32> to vector<64x128xf32>
    %13 = arith.addf %10, %12 : vector<64x128xf32>
    %c0_13 = arith.constant 0 : index
    %c0_14 = arith.constant 0 : index
    %14 = vector.load %arg6[%c0_13, %c0_14] : memref<256x128xf32, #tpu.memory_space<vmem>>, vector<256x128xf32>
    %cst_15 = arith.constant dense<0.000000e+00> : vector<64x128xf32>
    %15 = tpu.matmul %7, %14, %cst_15 {dimension_numbers = #tpu.dot_dimension_numbers<[1], [0], [0], [1], [0, 0, 1, 1], [], []>} : vector<64x256xf32>, vector<256x128xf32>, vector<64x128xf32> -> vector<64x128xf32>
    %c0_16 = arith.constant 0 : index
    %c0_17 = arith.constant 0 : index
    %16 = vector.load %arg7[%c0_16, %c0_17] : memref<1x128xf32, #tpu.memory_space<vmem>>, vector<1x128xf32>
    %17 = vector.broadcast %16 : vector<1x128xf32> to vector<64x128xf32>
    %18 = arith.addf %15, %17 : vector<64x128xf32>
    %19 = math.tanh %13 : vector<64x128xf32>
    %cst_18 = arith.constant 0.000000e+00 : f32
    %20 = vector.broadcast %cst_18 : f32 to vector<64x128xf32>
    %21 = arith.subf %20, %18 : vector<64x128xf32>
    %22 = math.exp %21 : vector<64x128xf32>
    %cst_19 = arith.constant 1.000000e+00 : f32
    %23 = vector.broadcast %cst_19 : f32 to vector<64x128xf32>
    %24 = arith.addf %23, %22 : vector<64x128xf32>
    %cst_20 = arith.constant 1.000000e+00 : f32
    %25 = vector.broadcast %cst_20 : f32 to vector<64x128xf32>
    %26 = arith.divf %25, %24 : vector<64x128xf32>
    %27 = arith.mulf %19, %26 : vector<64x128xf32>
    %c0_21 = arith.constant 0 : index
    %c0_22 = arith.constant 0 : index
    %28 = vector.load %arg8[%c0_21, %c0_22] : memref<128x1xf32, #tpu.memory_space<vmem>>, vector<128x1xf32>
    %cst_23 = arith.constant dense<0.000000e+00> : vector<64x1xf32>
    %29 = tpu.matmul %27, %28, %cst_23 {dimension_numbers = #tpu.dot_dimension_numbers<[1], [0], [0], [1], [0, 0, 1, 1], [], []>} : vector<64x128xf32>, vector<128x1xf32>, vector<64x1xf32> -> vector<64x1xf32>
    %c0_24 = arith.constant 0 : index
    %c0_25 = arith.constant 0 : index
    %30 = vector.load %arg9[%c0_24, %c0_25] : memref<1x1xf32, #tpu.memory_space<vmem>>, vector<1x1xf32>
    %31 = vector.broadcast %30 : vector<1x1xf32> to vector<64x1xf32>
    %32 = arith.addf %29, %31 : vector<64x1xf32>
    %c0_26 = arith.constant 0 : index
    %c0_27 = arith.constant 0 : index
    %33 = vector.load %arg11[%c0_26, %c0_27] : memref<64x1xf32, #tpu.memory_space<vmem>>, vector<64x1xf32>
    tpu.vector_store %arg11[%c0_26, %c0_27], %32 {strides = array<i32>} : memref<64x1xf32, #tpu.memory_space<vmem>>, vector<64x1xf32>,
    return
  }
  func.func @transform_0(%arg0: i32) -> (i32, i32) {
    %c0_i32 = arith.constant 0 : i32
    %c0_i32_0 = arith.constant 0 : i32
    return %arg0, %c0_i32 : i32, i32
  }
  func.func @transform_1(%arg0: i32) -> (i32, i32) {
    %c0_i32 = arith.constant 0 : i32
    %c0_i32_0 = arith.constant 0 : i32
    %c0_i32_1 = arith.constant 0 : i32
    return %c0_i32, %c0_i32_0 : i32, i32
  }
  func.func @transform_2(%arg0: i32) -> (i32, i32) {
    %c0_i32 = arith.constant 0 : i32
    %c0_i32_0 = arith.constant 0 : i32
    %c0_i32_1 = arith.constant 0 : i32
    return %c0_i32, %c0_i32_0 : i32, i32
  }
  func.func @transform_3(%arg0: i32) -> (i32, i32) {
    %c0_i32 = arith.constant 0 : i32
    %c0_i32_0 = arith.constant 0 : i32
    %c0_i32_1 = arith.constant 0 : i32
    return %c0_i32, %c0_i32_0 : i32, i32
  }
  func.func @transform_4(%arg0: i32) -> (i32, i32) {
    %c0_i32 = arith.constant 0 : i32
    %c0_i32_0 = arith.constant 0 : i32
    %c0_i32_1 = arith.constant 0 : i32
    return %c0_i32, %c0_i32_0 : i32, i32
  }
  func.func @transform_5(%arg0: i32) -> (i32, i32) {
    %c0_i32 = arith.constant 0 : i32
    %c0_i32_0 = arith.constant 0 : i32
    %c0_i32_1 = arith.constant 0 : i32
    return %c0_i32, %c0_i32_0 : i32, i32
  }
  func.func @transform_6(%arg0: i32) -> (i32, i32) {
    %c0_i32 = arith.constant 0 : i32
    %c0_i32_0 = arith.constant 0 : i32
    %c0_i32_1 = arith.constant 0 : i32
    return %c0_i32, %c0_i32_0 : i32, i32
  }
  func.func @transform_7(%arg0: i32) -> (i32, i32) {
    %c0_i32 = arith.constant 0 : i32
    %c0_i32_0 = arith.constant 0 : i32
    %c0_i32_1 = arith.constant 0 : i32
    return %c0_i32, %c0_i32_0 : i32, i32
  }
  func.func @transform_8(%arg0: i32) -> (i32, i32) {
    %c0_i32 = arith.constant 0 : i32
    %c0_i32_0 = arith.constant 0 : i32
    %c0_i32_1 = arith.constant 0 : i32
    return %c0_i32, %c0_i32_0 : i32, i32
  }
  func.func @transform_9(%arg0: i32) -> (i32, i32) {
    %c0_i32 = arith.constant 0 : i32
    %c0_i32_0 = arith.constant 0 : i32
    return %arg0, %c0_i32 : i32, i32
  }
  func.func @transform_10(%arg0: i32) -> (i32, i32) {
    %c0_i32 = arith.constant 0 : i32
    %c0_i32_0 = arith.constant 0 : i32
    return %arg0, %c0_i32 : i32, i32
  }
}

</mosaic_0001>

<llo_original>
// kernel: tpu_custom_call.1
$region0: #{tpu_custom_call.1}
  #allocation0 [shape = 'u32[]', space=smem, size = 0x4, offset = 0x4, fixed_abs, tag = 'smem constant byte address 0x4 - core index']
  #allocation1 [shape = 'u32[144,128]{1,0:T(1,128)}', space=vmem, size = 0x12000, scoped, tag = 'internal scratch']
  #allocation2 [shape = 'f32[1,1]{1,0:T(1,128)S(1)}', space=vmem, size = 0x200, scoped, tag = 'scoped memory for tpu_custom_call.1']
  %s0 = inlined_call_operand.hbm [shape: f32[256,384], index: 0, kind: input, shape index: {}]
  %s1 = inlined_call_operand.hbm [shape: f32[384,256], index: 1, kind: input, shape index: {}]
  %s2 = inlined_call_operand.vmem [shape: f32[1,256], index: 2, kind: input, shape index: {}]
  %s3 = inlined_call_operand.hbm [shape: f32[256,128], index: 3, kind: input, shape index: {}]
  %s4 = inlined_call_operand.vmem [shape: f32[1,128], index: 4, kind: input, shape index: {}]
  %s5 = inlined_call_operand.hbm [shape: f32[256,128], index: 5, kind: input, shape index: {}]
  %s6 = inlined_call_operand.vmem [shape: f32[1,128], index: 6, kind: input, shape index: {}]
  %s7 = inlined_call_operand.vmem [shape: f32[128,1], index: 7, kind: input, shape index: {}]
  %s8 = inlined_call_operand.<no memory space> [shape: f32[1,1], index: 8, kind: input, shape index: {}]
  %s9 = inlined_call_operand.hbm [shape: f32[256,256], index: 9, kind: output, shape index: {0}]
  %s10 = inlined_call_operand.vmem [shape: f32[256,1], index: 10, kind: output, shape index: {1}]
  %11 = xla_tuple %s9, %s10
  %s12 = sld [smem:[#allocation0]]
  $region93: #{tpu_custom_call.1} parent=0
    _
  %s14 = ssub.s32 1, %s12
  %s15 = scalar_select 0, %s14, %s12
  %v16 = vstv %s8
  %17 = vst [vmem:[#allocation2] sm:$0x1] %v16
  $region1: #{tpu_custom_call.1} parent=0
    #allocation3 [shape = 'u8[196608]{0}', space=vmem, size = 0x30000, scoped, tag = 'input window, operand 0']
    #allocation4 [shape = 's32[2]{0}', space=sflag, size = 0x8, scoped, tag = 'scoped memory for tpu_custom_call.1']
    #allocation5 [shape = 's32[2]{0}', space=sflag, size = 0x8, scoped, tag = 'scoped memory for tpu_custom_call.1']
    #allocation6 [shape = 'u8[393216]{0}', space=vmem, size = 0x60000, scoped, tag = 'input window, operand 1, single buffered']
    #allocation7 [shape = 's32[1]{0}', space=sflag, size = 0x4, scoped, tag = 'scoped memory for tpu_custom_call.1']
    #allocation8 [shape = 'u8[131072]{0}', space=vmem, size = 0x20000, scoped, tag = 'input window, operand 3, single buffered']
    #allocation9 [shape = 'u8[131072]{0}', space=vmem, size = 0x20000, scoped, tag = 'input window, operand 5, single buffered']
    #allocation10 [shape = 's32[1]{0}', space=sflag, size = 0x4, scoped, tag = 'scoped memory for tpu_custom_call.1']
    #allocation11 [shape = 'u8[131072]{0}', space=vmem, size = 0x20000, scoped, tag = 'output window, operand 0']
    %18 = vsyncpa [#allocation4], 0
    %s19 = scalar_lea.sflag [#allocation4], 1
    %20 = vsyncpa %s19, 0
    %21 = vsyncpa [#allocation7], 0
    %22 = vsyncpa [#allocation10], 0
    %23 = vsyncpa [#allocation5], 0
    %s24 = scalar_lea.sflag [#allocation5], 1
    %25 = vsyncpa %s24, 0
    loop: start=0, step=1, limit=6
    $region2: #{tpu_custom_call.1} parent=1 // loop_pre_header
      _
    $region3: #{tpu_custom_call.1} parent=1 // loop_header
      %s27 = sphi 0, %s31
      %p28 = scmp.ge.s32.totalorder %s27, 6
      %s37 = sphi 0, %s39
      %s40 = sphi 0, %s37
      %s41 = sphi 0, %s40
      %s57 = sphi 0, %s41
      %s61 = sphi 0, %s61
      %s63 = sphi 0, %s61
      %s64 = sphi 0, %s63
      %s78 = sphi 0, %s64
      %s82 = sphi 0, %s82
      %s84 = sphi 0, %s82
      %s85 = sphi 0, %s84
      %s99 = sphi 0, %s85
      %s103 = sphi 0, %s103
      %s105 = sphi 0, %s103
      %s106 = sphi 0, %s105
      %s120 = sphi 0, %s106
      %s124 = sphi 0, %s124
      %s126 = sphi 0, %s124
      %s127 = sphi 0, %s126
      %s141 = sphi 0, %s127
      %s145 = sphi 0, %s145
      %s147 = sphi 0, %s145
      %s148 = sphi 0, %s147
      %s162 = sphi 0, %s148
      %s166 = sphi 0, %s166
      %s168 = sphi 0, %s166
      %s169 = sphi 0, %s168
      %s183 = sphi 0, %s169
      %s187 = sphi 0, %s187
      %s189 = sphi 0, %s187
      %s190 = sphi 0, %s189
      %s204 = sphi 0, %s190
      %s208 = sphi 0, %s208
      %s210 = sphi 0, %s208
      %s211 = sphi 0, %s210
      %s225 = sphi 0, %s211
      %s231 = sphi 0, %s233
      %s234 = sphi 0, %s231
      %s235 = sphi 0, %s234
      %s251 = sphi 0, %s235
      %s257 = sphi 0, %s259
      %s260 = sphi 0, %s257
      %s261 = sphi 0, %s260
      %s277 = sphi 0, %s261
    $region4: #{tpu_custom_call.1} parent=1 // loop_header_branch
      %30 = sbr.rel (%p28) target = $region8
    $region5: #{tpu_custom_call.1} parent=1 // loop_body
      %s32 = ssub.s32 %s27, 1
      %s33 = ssub.s32 %s27, 2
      %s34 = sadd.s32 %s27, 1
      %s35 = ssub.s32 %s27, %s34
      %p36 = scmp.eq.s32.totalorder %s35, 0
      %s38 = sadd.s32 %s37, 1
      %s39 = scalar_select %p36, %s37, %s38
      %p42 = pneg %p36
      %p43 = scmp.eq.s32.totalorder %s27, 3
      %p44 = por %p42, %p43
      %p45 = scmp.ne.s32.totalorder %s37, %s40
      %p46 = scmp.eq.s32.totalorder %s27, 0
      %p47 = por %p45, %p46
      %p48 = scmp.ne.s32.totalorder %s37, %s40
      %p49 = scmp.eq.s32.totalorder %s32, 3
      %p50 = por %p48, %p49
      %p51 = scmp.ne.s32.totalorder %s40, %s41
      %p52 = scmp.eq.s32.totalorder %s32, 0
      %p53 = por %p51, %p52
      %p54 = scmp.ne.s32.totalorder %s40, %s41
      %p55 = scmp.eq.s32.totalorder %s33, 3
      %p56 = por %p54, %p55
      %p58 = scmp.ne.s32.totalorder %s41, %s57
      %p59 = scmp.eq.s32.totalorder %s33, 0
      %p60 = por %p58, %p59
      %s62 = sadd.s32 %s61, 1
      %p65 = scmp.eq.s32.totalorder %s27, 3
      %p66 = scmp.ne.s32.totalorder %s61, %s63
      %p67 = scmp.eq.s32.totalorder %s27, 0
      %p68 = por %p66, %p67
      %p69 = scmp.ne.s32.totalorder %s61, %s63
      %p70 = scmp.eq.s32.totalorder %s32, 3
      %p71 = por %p69, %p70
      %p72 = scmp.ne.s32.totalorder %s63, %s64
      %p73 = scmp.eq.s32.totalorder %s32, 0
      %p74 = por %p72, %p73
      %p75 = scmp.ne.s32.totalorder %s63, %s64
      %p76 = scmp.eq.s32.totalorder %s33, 3
      %p77 = por %p75, %p76
      %p79 = scmp.ne.s32.totalorder %s64, %s78
      %p80 = scmp.eq.s32.totalorder %s33, 0
      %p81 = por %p79, %p80
      %s83 = sadd.s32 %s82, 1
      %p86 = scmp.eq.s32.totalorder %s27, 3
      %p87 = scmp.ne.s32.totalorder %s82, %s84
      %p88 = scmp.eq.s32.totalorder %s27, 0
      %p89 = por %p87, %p88
      %p90 = scmp.ne.s32.totalorder %s82, %s84
      %p91 = scmp.eq.s32.totalorder %s32, 3
      %p92 = por %p90, %p91
      %p93 = scmp.ne.s32.totalorder %s84, %s85
      %p94 = scmp.eq.s32.totalorder %s32, 0
      %p95 = por %p93, %p94
      %p96 = scmp.ne.s32.totalorder %s84, %s85
      %p97 = scmp.eq.s32.totalorder %s33, 3
      %p98 = por %p96, %p97
      %p100 = scmp.ne.s32.totalorder %s85, %s99
      %p101 = scmp.eq.s32.totalorder %s33, 0
      %p102 = por %p100, %p101
      %s104 = sadd.s32 %s103, 1
      %p107 = scmp.eq.s32.totalorder %s27, 3
      %p108 = scmp.ne.s32.totalorder %s103, %s105
      %p109 = scmp.eq.s32.totalorder %s27, 0
      %p110 = por %p108, %p109
      %p111 = scmp.ne.s32.totalorder %s103, %s105
      %p112 = scmp.eq.s32.totalorder %s32, 3
      %p113 = por %p111, %p112
      %p114 = scmp.ne.s32.totalorder %s105, %s106
      %p115 = scmp.eq.s32.totalorder %s32, 0
      %p116 = por %p114, %p115
      %p117 = scmp.ne.s32.totalorder %s105, %s106
      %p118 = scmp.eq.s32.totalorder %s33, 3
      %p119 = por %p117, %p118
      %p121 = scmp.ne.s32.totalorder %s106, %s120
      %p122 = scmp.eq.s32.totalorder %s33, 0
      %p123 = por %p121, %p122
      %s125 = sadd.s32 %s124, 1
      %p128 = scmp.eq.s32.totalorder %s27, 3
      %p129 = scmp.ne.s32.totalorder %s124, %s126
      %p130 = scmp.eq.s32.totalorder %s27, 0
      %p131 = por %p129, %p130
      %p132 = scmp.ne.s32.totalorder %s124, %s126
      %p133 = scmp.eq.s32.totalorder %s32, 3
      %p134 = por %p132, %p133
      %p135 = scmp.ne.s32.totalorder %s126, %s127
      %p136 = scmp.eq.s32.totalorder %s32, 0
      %p137 = por %p135, %p136
      %p138 = scmp.ne.s32.totalorder %s126, %s127
      %p139 = scmp.eq.s32.totalorder %s33, 3
      %p140 = por %p138, %p139
      %p142 = scmp.ne.s32.totalorder %s127, %s141
      %p143 = scmp.eq.s32.totalorder %s33, 0
      %p144 = por %p142, %p143
      %s146 = sadd.s32 %s145, 1
      %p149 = scmp.eq.s32.totalorder %s27, 3
      %p150 = scmp.ne.s32.totalorder %s145, %s147
      %p151 = scmp.eq.s32.totalorder %s27, 0
      %p152 = por %p150, %p151
      %p153 = scmp.ne.s32.totalorder %s145, %s147
      %p154 = scmp.eq.s32.totalorder %s32, 3
      %p155 = por %p153, %p154
      %p156 = scmp.ne.s32.totalorder %s147, %s148
      %p157 = scmp.eq.s32.totalorder %s32, 0
      %p158 = por %p156, %p157
      %p159 = scmp.ne.s32.totalorder %s147, %s148
      %p160 = scmp.eq.s32.totalorder %s33, 3
      %p161 = por %p159, %p160
      %p163 = scmp.ne.s32.totalorder %s148, %s162
      %p164 = scmp.eq.s32.totalorder %s33, 0
      %p165 = por %p163, %p164
      %s167 = sadd.s32 %s166, 1
      %p170 = scmp.eq.s32.totalorder %s27, 3
      %p171 = scmp.ne.s32.totalorder %s166, %s168
      %p172 = scmp.eq.s32.totalorder %s27, 0
      %p173 = por %p171, %p172
      %p174 = scmp.ne.s32.totalorder %s166, %s168
      %p175 = scmp.eq.s32.totalorder %s32, 3
      %p176 = por %p174, %p175
      %p177 = scmp.ne.s32.totalorder %s168, %s169
      %p178 = scmp.eq.s32.totalorder %s32, 0
      %p179 = por %p177, %p178
      %p180 = scmp.ne.s32.totalorder %s168, %s169
      %p181 = scmp.eq.s32.totalorder %s33, 3
      %p182 = por %p180, %p181
      %p184 = scmp.ne.s32.totalorder %s169, %s183
      %p185 = scmp.eq.s32.totalorder %s33, 0
      %p186 = por %p184, %p185
      %s188 = sadd.s32 %s187, 1
      %p191 = scmp.eq.s32.totalorder %s27, 3
      %p192 = scmp.ne.s32.totalorder %s187, %s189
      %p193 = scmp.eq.s32.totalorder %s27, 0
      %p194 = por %p192, %p193
      %p195 = scmp.ne.s32.totalorder %s187, %s189
      %p196 = scmp.eq.s32.totalorder %s32, 3
      %p197 = por %p195, %p196
      %p198 = scmp.ne.s32.totalorder %s189, %s190
      %p199 = scmp.eq.s32.totalorder %s32, 0
      %p200 = por %p198, %p199
      %p201 = scmp.ne.s32.totalorder %s189, %s190
      %p202 = scmp.eq.s32.totalorder %s33, 3
      %p203 = por %p201, %p202
      %p205 = scmp.ne.s32.totalorder %s190, %s204
      %p206 = scmp.eq.s32.totalorder %s33, 0
      %p207 = por %p205, %p206
      %s209 = sadd.s32 %s208, 1
      %p212 = scmp.eq.s32.totalorder %s27, 3
      %p213 = scmp.ne.s32.totalorder %s208, %s210
      %p214 = scmp.eq.s32.totalorder %s27, 0
      %p215 = por %p213, %p214
      %p216 = scmp.ne.s32.totalorder %s208, %s210
      %p217 = scmp.eq.s32.totalorder %s32, 3
      %p218 = por %p216, %p217
      %p219 = scmp.ne.s32.totalorder %s210, %s211
      %p220 = scmp.eq.s32.totalorder %s32, 0
      %p221 = por %p219, %p220
      %p222 = scmp.ne.s32.totalorder %s210, %s211
      %p223 = scmp.eq.s32.totalorder %s33, 3
      %p224 = por %p222, %p223
      %p226 = scmp.ne.s32.totalorder %s211, %s225
      %p227 = scmp.eq.s32.totalorder %s33, 0
      %p228 = por %p226, %p227
      %s229 = ssub.s32 %s27, %s34
      %p230 = scmp.eq.s32.totalorder %s229, 0
      %s232 = sadd.s32 %s231, 1
      %s233 = scalar_select %p230, %s231, %s232
      %p236 = pneg %p230
      %p237 = scmp.eq.s32.totalorder %s27, 3
      %p238 = por %p236, %p237
      %p239 = scmp.ne.s32.totalorder %s231, %s234
      %p240 = scmp.eq.s32.totalorder %s27, 0
      %p241 = por %p239, %p240
      %p242 = scmp.ne.s32.totalorder %s231, %s234
      %p243 = scmp.eq.s32.totalorder %s32, 3
      %p244 = por %p242, %p243
      %p245 = scmp.ne.s32.totalorder %s234, %s235
      %p246 = scmp.eq.s32.totalorder %s32, 0
      %p247 = por %p245, %p246
      %p248 = scmp.ne.s32.totalorder %s234, %s235
      %p249 = scmp.eq.s32.totalorder %s33, 3
      %p250 = por %p248, %p249
      %p252 = scmp.ne.s32.totalorder %s235, %s251
      %p253 = scmp.eq.s32.totalorder %s33, 0
      %p254 = por %p252, %p253
      %s255 = ssub.s32 %s27, %s34
      %p256 = scmp.eq.s32.totalorder %s255, 0
      %s258 = sadd.s32 %s257, 1
      %s259 = scalar_select %p256, %s257, %s258
      %p262 = pneg %p256
      %p263 = scmp.eq.s32.totalorder %s27, 3
      %p264 = por %p262, %p263
      %p265 = scmp.ne.s32.totalorder %s257, %s260
      %p266 = scmp.eq.s32.totalorder %s27, 0
      %p267 = por %p265, %p266
      %p268 = scmp.ne.s32.totalorder %s257, %s260
      %p269 = scmp.eq.s32.totalorder %s32, 3
      %p270 = por %p268, %p269
      %p271 = scmp.ne.s32.totalorder %s260, %s261
      %p272 = scmp.eq.s32.totalorder %s32, 0
      %p273 = por %p271, %p272
      %p274 = scmp.ne.s32.totalorder %s260, %s261
      %p275 = scmp.eq.s32.totalorder %s33, 3
      %p276 = por %p274, %p275
      %p278 = scmp.ne.s32.totalorder %s261, %s277
      %p279 = scmp.eq.s32.totalorder %s33, 0
      %p280 = por %p278, %p279
      %p281 = scmp.le.s32.totalorder 1, %s27
      %p282 = scmp.lt.s32.totalorder %s27, 5
      %p283 = pnand %p281, %p282
      %p284 = pneg %p283
      // Predicated region
      $region9: #{tpu_custom_call.1} parent=5 // pred_check
        _
      $region10: #{tpu_custom_call.1} parent=5 // pred_check_branch
        %286 = sbr.rel (%p283) target = $region12
      $region11: #{tpu_custom_call.1} parent=5 // pred_region
        %s287 = ssub.s32 %s27, 1
        // Predicated region
        $region13: #{tpu_custom_call.1} parent=11 // pred_check
          %p288 = pneg %p74
        $region14: #{tpu_custom_call.1} parent=11 // pred_check_branch
          %290 = sbr.rel (%p288) target = $region16
        $region15: #{tpu_custom_call.1} parent=11 // pred_region
          %s292 = ssub.s32 12288, 12288
          %293 = vsyncadd [#allocation7], %s292
          %s294 = sshll.u32 [#allocation6], 4
          %s295 = int_to_ptr.vmem [resolvable:$true] %s294
          %300 = dma.hbm_to_vmem [thread:$0]  %s1, 12288, %s295, [#allocation7], 256, 256, 16
        $region16: #{tpu_custom_call.1} parent=11 // pred_fallthru
          _
        // Predicated region
        $region17: #{tpu_custom_call.1} parent=11 // pred_check
          %p301 = pneg %p95
        $region18: #{tpu_custom_call.1} parent=11 // pred_check_branch
          %303 = sbr.rel (%p301) target = $region20
        $region19: #{tpu_custom_call.1} parent=11 // pred_region
          _
        $region20: #{tpu_custom_call.1} parent=11 // pred_fallthru
          _
        // Predicated region
        $region21: #{tpu_custom_call.1} parent=11 // pred_check
          %p304 = pneg %p116
        $region22: #{tpu_custom_call.1} parent=11 // pred_check_branch
          %306 = sbr.rel (%p304) target = $region24
        $region23: #{tpu_custom_call.1} parent=11 // pred_region
          %s308 = ssub.s32 4096, 4096
          %309 = vsyncadd [#allocation7], %s308
          %s310 = sshll.u32 [#allocation8], 4
          %s311 = int_to_ptr.vmem [resolvable:$true] %s310
          %316 = dma.hbm_to_vmem [thread:$0]  %s3, 4096, %s311, [#allocation7], 128, 128, 8
        $region24: #{tpu_custom_call.1} parent=11 // pred_fallthru
          _
        // Predicated region
        $region25: #{tpu_custom_call.1} parent=11 // pred_check
          %p317 = pneg %p137
        $region26: #{tpu_custom_call.1} parent=11 // pred_check_branch
          %319 = sbr.rel (%p317) target = $region28
        $region27: #{tpu_custom_call.1} parent=11 // pred_region
          _
        $region28: #{tpu_custom_call.1} parent=11 // pred_fallthru
          _
        // Predicated region
        $region29: #{tpu_custom_call.1} parent=11 // pred_check
          %p320 = pneg %p158
        $region30: #{tpu_custom_call.1} parent=11 // pred_check_branch
          %322 = sbr.rel (%p320) target = $region32
        $region31: #{tpu_custom_call.1} parent=11 // pred_region
          %s324 = ssub.s32 4096, 4096
          %325 = vsyncadd [#allocation10], %s324
          %s326 = sshll.u32 [#allocation9], 4
          %s327 = int_to_ptr.vmem [resolvable:$true] %s326
          %332 = dma.hbm_to_vmem [thread:$0]  %s5, 4096, %s327, [#allocation10], 128, 128, 8
        $region32: #{tpu_custom_call.1} parent=11 // pred_fallthru
          _
        // Predicated region
        $region33: #{tpu_custom_call.1} parent=11 // pred_check
          %p333 = pneg %p179
        $region34: #{tpu_custom_call.1} parent=11 // pred_check_branch
          %335 = sbr.rel (%p333) target = $region36
        $region35: #{tpu_custom_call.1} parent=11 // pred_region
          _
        $region36: #{tpu_custom_call.1} parent=11 // pred_fallthru
          _
        // Predicated region
        $region37: #{tpu_custom_call.1} parent=11 // pred_check
          %p336 = pneg %p200
        $region38: #{tpu_custom_call.1} parent=11 // pred_check_branch
          %338 = sbr.rel (%p336) target = $region40
        $region39: #{tpu_custom_call.1} parent=11 // pred_region
          _
        $region40: #{tpu_custom_call.1} parent=11 // pred_fallthru
          _
        // Predicated region
        $region41: #{tpu_custom_call.1} parent=11 // pred_check
          %p339 = pneg %p221
        $region42: #{tpu_custom_call.1} parent=11 // pred_check_branch
          %341 = sbr.rel (%p339) target = $region44
        $region43: #{tpu_custom_call.1} parent=11 // pred_region
          _
        $region44: #{tpu_custom_call.1} parent=11 // pred_fallthru
          _
      $region12: #{tpu_custom_call.1} parent=5 // pred_fallthru
        _
      %p342 = scmp.lt.s32.totalorder %s27, 4
      // Predicated region
      $region45: #{tpu_custom_call.1} parent=5 // pred_check
        %p343 = pneg %p342
      $region46: #{tpu_custom_call.1} parent=5 // pred_check_branch
        %345 = sbr.rel (%p343) target = $region48
      $region47: #{tpu_custom_call.1} parent=5 // pred_region
        // Predicated region
        $region49: #{tpu_custom_call.1} parent=47 // pred_check
          %p346 = pneg %p47
        $region50: #{tpu_custom_call.1} parent=47 // pred_check_branch
          %348 = sbr.rel (%p346) target = $region52
        $region51: #{tpu_custom_call.1} parent=47 // pred_region
          %s349 = sand.u32 %s37, 1
          %s350 = scalar_lea.sflag [#allocation4], %s349
          %s351 = sand.u32 %s37, 1
          %s352 = smul.addr %s351, 192
          %s353 = scalar_lea.vmem [#allocation3], %s352
          %s354 = smul.u32 8, %s27
          %s356 = ssub.s32 3072, 3072
          %357 = vsyncadd %s350, %s356
          %s358 = smul.addr %s354, 3
          %s359 = smul.addr %s358, 128
          %s360 = scalar_lea.hbm %s0, %s359
          %s361 = sshll.u32 %s353, 4
          %s362 = int_to_ptr.vmem [resolvable:$true] %s361
          %367 = dma.hbm_to_vmem [thread:$0]  %s360, 3072, %s362, %s350, 384, 384, 24
        $region52: #{tpu_custom_call.1} parent=47 // pred_fallthru
          _
      $region48: #{tpu_custom_call.1} parent=5 // pred_fallthru
        _
      %p368 = scmp.le.s32.totalorder 1, %s27
      %p369 = scmp.lt.s32.totalorder %s27, 5
      %p370 = pnand %p368, %p369
      %p371 = pneg %p370
      // Predicated region
      $region53: #{tpu_custom_call.1} parent=5 // pred_check
        _
      $region54: #{tpu_custom_call.1} parent=5 // pred_check_branch
        %373 = sbr.rel (%p370) target = $region56
      $region55: #{tpu_custom_call.1} parent=5 // pred_region
        %s374 = ssub.s32 %s27, 1
        %s375 = sand.u32 %s40, 1
        %s376 = scalar_lea.sflag [#allocation4], %s375
        %s377 = sand.u32 %s40, 1
        %s378 = smul.addr %s377, 192
        %s379 = scalar_lea.vmem [#allocation3], %s378
        // Predicated region
        $region57: #{tpu_custom_call.1} parent=55 // pred_check
          %p380 = pneg %p53
        $region58: #{tpu_custom_call.1} parent=55 // pred_check_branch
          %382 = sbr.rel (%p380) target = $region60
        $region59: #{tpu_custom_call.1} parent=55 // pred_region
          %383 = dma.done %s376, 3072
        $region60: #{tpu_custom_call.1} parent=55 // pred_fallthru
          _
        // Predicated region
        $region61: #{tpu_custom_call.1} parent=55 // pred_check
          %p384 = pneg %p74
        $region62: #{tpu_custom_call.1} parent=55 // pred_check_branch
          %386 = sbr.rel (%p384) target = $region64
        $region63: #{tpu_custom_call.1} parent=55 // pred_region
          %387 = dma.done [#allocation7], 12288
        $region64: #{tpu_custom_call.1} parent=55 // pred_fallthru
          _
        // Predicated region
        $region65: #{tpu_custom_call.1} parent=55 // pred_check
          %p388 = pneg %p116
        $region66: #{tpu_custom_call.1} parent=55 // pred_check_branch
          %390 = sbr.rel (%p388) target = $region68
        $region67: #{tpu_custom_call.1} parent=55 // pred_region
          %391 = dma.done [#allocation7], 4096
        $region68: #{tpu_custom_call.1} parent=55 // pred_fallthru
          _
        // Predicated region
        $region69: #{tpu_custom_call.1} parent=55 // pred_check
          %p392 = pneg %p158
        $region70: #{tpu_custom_call.1} parent=55 // pred_check_branch
          %394 = sbr.rel (%p392) target = $region72
        $region71: #{tpu_custom_call.1} parent=55 // pred_region
          %395 = dma.done [#allocation10], 4096
        $region72: #{tpu_custom_call.1} parent=55 // pred_fallthru
          _
        %s396 = sand.u32 %s40, 1
        %s397 = scalar_lea.sflag [#allocation4], %s396
        %s398 = sand.u32 %s40, 1
        %s399 = smul.addr %s398, 192
        %s400 = scalar_lea.vmem [#allocation3], %s399
        %p401 = pneg %p53
        %p402 = pneg %p50
        %p403 = pneg %p74
        %p404 = pneg %p71
        %p405 = pneg %p95
        %p406 = pneg %p92
        %p407 = pneg %p116
        %p408 = pneg %p113
        %p409 = pneg %p137
        %p410 = pneg %p134
        %p411 = pneg %p158
        %p412 = pneg %p155
        %p413 = pneg %p179
        %p414 = pneg %p176
        %p415 = pneg %p200
        %p416 = pneg %p197
        %p417 = pneg %p221
        %p418 = pneg %p218
        %p419 = pneg %p247
        %p420 = pneg %p244
        %s421 = sand.u32 %s234, 1
        %s422 = scalar_lea.sflag [#allocation5], %s421
        %s423 = sand.u32 %s234, 1
        %s424 = smul.addr %s423, 128
        %s425 = scalar_lea.vmem [#allocation11], %s424
        %p426 = pneg %p273
        %p427 = pneg %p270
        %s428 = smul.u32 8, %s32
        %p429 = scmp.lt.s32.totalorder %s428, 31
        %s430 = scalar_select %p429, %s428, 31
        %s431 = smul.addr %s430, 8
        %s432 = scalar_lea.vmem %s10, %s431
        %s433 = smul.u32 8, %s32
        %s434 = smul.u32 8, %s32
        %s435 = smul.u32 8, %s32
        %p436 = scmp.lt.s32.totalorder %s435, 31
        %s437 = scalar_select %p436, %s435, 31
        %s438 = smul.addr %s437, 8
        %s439 = scalar_lea.vmem %s10, %s438
        %s440 = smul.u32 8, %s32
        %v441 = vld [vmem:[%s379] sm:$0xff]
        %v442 = vld [vmem:[%s379 + $0x8] sm:$0xff]
        %v443 = vld [vmem:[%s379 + $0x10] sm:$0xff]
        %v444 = vld [vmem:[%s379 + $0x18] sm:$0xff]
        %v445 = vld [vmem:[%s379 + $0x20] sm:$0xff]
        %v446 = vld [vmem:[%s379 + $0x28] sm:$0xff]
        %v447 = vld [vmem:[%s379 + $0x30] sm:$0xff]
        %v448 = vld [vmem:[%s379 + $0x38] sm:$0xff]
        %v449 = vld [vmem:[%s379 + $0x40] sm:$0xff]
        %v450 = vld [vmem:[%s379 + $0x48] sm:$0xff]
        %v451 = vld [vmem:[%s379 + $0x50] sm:$0xff]
        %v452 = vld [vmem:[%s379 + $0x58] sm:$0xff]
        %v453 = vld [vmem:[%s379 + $0x60] sm:$0xff]
        %v454 = vld [vmem:[%s379 + $0x68] sm:$0xff]
        %v455 = vld [vmem:[%s379 + $0x70] sm:$0xff]
        %v456 = vld [vmem:[%s379 + $0x78] sm:$0xff]
        %v457 = vld [vmem:[%s379 + $0x80] sm:$0xff]
        %v458 = vld [vmem:[%s379 + $0x88] sm:$0xff]
        %v459 = vld [vmem:[%s379 + $0x90] sm:$0xff]
        %v460 = vld [vmem:[%s379 + $0x98] sm:$0xff]
        %v461 = vld [vmem:[%s379 + $0xa0] sm:$0xff]
        %v462 = vld [vmem:[%s379 + $0xa8] sm:$0xff]
        %v463 = vld [vmem:[%s379 + $0xb0] sm:$0xff]
        %v464 = vld [vmem:[%s379 + $0xb8] sm:$0xff]
        %v465 = vld [vmem:[#allocation6] sm:$0xff]
        %v466 = vld [vmem:[#allocation6 + $0x8] sm:$0xff]
        %v467 = vld [vmem:[#allocation6 + $0x10] sm:$0xff]
        %v468 = vld [vmem:[#allocation6 + $0x18] sm:$0xff]
        %v469 = vld [vmem:[#allocation6 + $0x20] sm:$0xff]
        %v470 = vld [vmem:[#allocation6 + $0x28] sm:$0xff]
        %v471 = vld [vmem:[#allocation6 + $0x30] sm:$0xff]
        %v472 = vld [vmem:[#allocation6 + $0x38] sm:$0xff]
        %v473 = vld [vmem:[#allocation6 + $0x40] sm:$0xff]
        %v474 = vld [vmem:[#allocation6 + $0x48] sm:$0xff]
        %v475 = vld [vmem:[#allocation6 + $0x50] sm:$0xff]
        %v476 = vld [vmem:[#allocation6 + $0x58] sm:$0xff]
        %v477 = vld [vmem:[#allocation6 + $0x60] sm:$0xff]
        %v478 = vld [vmem:[#allocation6 + $0x68] sm:$0xff]
        %v479 = vld [vmem:[#allocation6 + $0x70] sm:$0xff]
        %v480 = vld [vmem:[#allocation6 + $0x78] sm:$0xff]
        %v481 = vld [vmem:[#allocation6 + $0x80] sm:$0xff]
        %v482 = vld [vmem:[#allocation6 + $0x88] sm:$0xff]
        %v483 = vld [vmem:[#allocation6 + $0x90] sm:$0xff]
        %v484 = vld [vmem:[#allocation6 + $0x98] sm:$0xff]
        %v485 = vld [vmem:[#allocation6 + $0xa0] sm:$0xff]
        %v486 = vld [vmem:[#allocation6 + $0xa8] sm:$0xff]
        %v487 = vld [vmem:[#allocation6 + $0xb0] sm:$0xff]
        %v488 = vld [vmem:[#allocation6 + $0xb8] sm:$0xff]
        %v489 = vld [vmem:[#allocation6 + $0xc0] sm:$0xff]
        %v490 = vld [vmem:[#allocation6 + $0xc8] sm:$0xff]
        %v491 = vld [vmem:[#allocation6 + $0xd0] sm:$0xff]
        %v492 = vld [vmem:[#allocation6 + $0xd8] sm:$0xff]
        %v493 = vld [vmem:[#allocation6 + $0xe0] sm:$0xff]
        %v494 = vld [vmem:[#allocation6 + $0xe8] sm:$0xff]
        %v495 = vld [vmem:[#allocation6 + $0xf0] sm:$0xff]
        %v496 = vld [vmem:[#allocation6 + $0xf8] sm:$0xff]
        %v497 = vld [vmem:[#allocation6 + $0x100] sm:$0xff]
        %v498 = vld [vmem:[#allocation6 + $0x108] sm:$0xff]
        %v499 = vld [vmem:[#allocation6 + $0x110] sm:$0xff]
        %v500 = vld [vmem:[#allocation6 + $0x118] sm:$0xff]
        %v501 = vld [vmem:[#allocation6 + $0x120] sm:$0xff]
        %v502 = vld [vmem:[#allocation6 + $0x128] sm:$0xff]
        %v503 = vld [vmem:[#allocation6 + $0x130] sm:$0xff]
        %v504 = vld [vmem:[#allocation6 + $0x138] sm:$0xff]
        %v505 = vld [vmem:[#allocation6 + $0x140] sm:$0xff]
        %v506 = vld [vmem:[#allocation6 + $0x148] sm:$0xff]
        %v507 = vld [vmem:[#allocation6 + $0x150] sm:$0xff]
        %v508 = vld [vmem:[#allocation6 + $0x158] sm:$0xff]
        %v509 = vld [vmem:[#allocation6 + $0x160] sm:$0xff]
        %v510 = vld [vmem:[#allocation6 + $0x168] sm:$0xff]
        %v511 = vld [vmem:[#allocation6 + $0x170] sm:$0xff]
        %v512 = vld [vmem:[#allocation6 + $0x178] sm:$0xff]
        %v513 = vld [vmem:[#allocation6 + $0x180] sm:$0xff]
        %v514 = vld [vmem:[#allocation6 + $0x188] sm:$0xff]
        %v515 = vld [vmem:[#allocation6 + $0x190] sm:$0xff]
        %v516 = vld [vmem:[#allocation6 + $0x198] sm:$0xff]
        %v517 = vld [vmem:[#allocation6 + $0x1a0] sm:$0xff]
        %v518 = vld [vmem:[#allocation6 + $0x1a8] sm:$0xff]
        %v519 = vld [vmem:[#allocation6 + $0x1b0] sm:$0xff]
        %v520 = vld [vmem:[#allocation6 + $0x1b8] sm:$0xff]
        %v521 = vld [vmem:[#allocation6 + $0x1c0] sm:$0xff]
        %v522 = vld [vmem:[#allocation6 + $0x1c8] sm:$0xff]
        %v523 = vld [vmem:[#allocation6 + $0x1d0] sm:$0xff]
        %v524 = vld [vmem:[#allocation6 + $0x1d8] sm:$0xff]
        %v525 = vld [vmem:[#allocation6 + $0x1e0] sm:$0xff]
        %v526 = vld [vmem:[#allocation6 + $0x1e8] sm:$0xff]
        %v527 = vld [vmem:[#allocation6 + $0x1f0] sm:$0xff]
        %v528 = vld [vmem:[#allocation6 + $0x1f8] sm:$0xff]
        %v529 = vld [vmem:[#allocation6 + $0x200] sm:$0xff]
        %v530 = vld [vmem:[#allocation6 + $0x208] sm:$0xff]
        %v531 = vld [vmem:[#allocation6 + $0x210] sm:$0xff]
        %v532 = vld [vmem:[#allocation6 + $0x218] sm:$0xff]
        %v533 = vld [vmem:[#allocation6 + $0x220] sm:$0xff]
        %v534 = vld [vmem:[#allocation6 + $0x228] sm:$0xff]
        %v535 = vld [vmem:[#allocation6 + $0x230] sm:$0xff]
        %v536 = vld [vmem:[#allocation6 + $0x238] sm:$0xff]
        %v537 = vld [vmem:[#allocation6 + $0x240] sm:$0xff]
        %v538 = vld [vmem:[#allocation6 + $0x248] sm:$0xff]
        %v539 = vld [vmem:[#allocation6 + $0x250] sm:$0xff]
        %v540 = vld [vmem:[#allocation6 + $0x258] sm:$0xff]
        %v541 = vld [vmem:[#allocation6 + $0x260] sm:$0xff]
        %v542 = vld [vmem:[#allocation6 + $0x268] sm:$0xff]
        %v543 = vld [vmem:[#allocation6 + $0x270] sm:$0xff]
        %v544 = vld [vmem:[#allocation6 + $0x278] sm:$0xff]
        %v545 = vld [vmem:[#allocation6 + $0x280] sm:$0xff]
        %v546 = vld [vmem:[#allocation6 + $0x288] sm:$0xff]
        %v547 = vld [vmem:[#allocation6 + $0x290] sm:$0xff]
        %v548 = vld [vmem:[#allocation6 + $0x298] sm:$0xff]
        %v549 = vld [vmem:[#allocation6 + $0x2a0] sm:$0xff]
        %v550 = vld [vmem:[#allocation6 + $0x2a8] sm:$0xff]
        %v551 = vld [vmem:[#allocation6 + $0x2b0] sm:$0xff]
        %v552 = vld [vmem:[#allocation6 + $0x2b8] sm:$0xff]
        %v553 = vld [vmem:[#allocation6 + $0x2c0] sm:$0xff]
        %v554 = vld [vmem:[#allocation6 + $0x2c8] sm:$0xff]
        %v555 = vld [vmem:[#allocation6 + $0x2d0] sm:$0xff]
        %v556 = vld [vmem:[#allocation6 + $0x2d8] sm:$0xff]
        %v557 = vld [vmem:[#allocation6 + $0x2e0] sm:$0xff]
        %v558 = vld [vmem:[#allocation6 + $0x2e8] sm:$0xff]
        %v559 = vld [vmem:[#allocation6 + $0x2f0] sm:$0xff]
        %v560 = vld [vmem:[#allocation6 + $0x2f8] sm:$0xff]
        %v561 = vld [vmem:[%s2] sm:$0x3]
        %v563 = vlaneseq
        %v564 = vshrl.u32 %v563, 7
        %v565 = vsub.s32 0, %v564
        %v566 = vrot.slane %v561, %v565
        %v567 = vlaneseq
        %v568 = vshrl.u32 %v567, 7
        %v569 = vsub.s32 1, %v568
        %v570 = vrot.slane %v561, %v569
        %573 = vmatprep.subr.mxu0 %v466
        %574 = vmatpush1.msra.mxu0 %v465
        %575 = vmatprep.subr.mxu0 %v468
        %576 = vmatpush1.msra.mxu0 %v467
        %577 = vmatprep.subr.mxu0 %v470
        %578 = vmatpush1.msra.mxu0 %v469
        %579 = vmatprep.subr.mxu0 %v472
        %580 = vmatpush1.msra.mxu0 %v471
        %581 = vmatprep.subr.mxu0 %v474
        %582 = vmatpush1.msra.mxu0 %v473
        %583 = vmatprep.subr.mxu0 %v476
        %584 = vmatpush1.msra.mxu0 %v475
        %585 = vmatprep.subr.mxu0 %v478
        %586 = vmatpush1.msra.mxu0 %v477
        %587 = vmatprep.subr.mxu0 %v480
        %588 = vmatpush1.msra.mxu0 %v479
        %589 = vmatprep.subr.mxu0 %v482
        %590 = vmatpush1.msra.mxu0 %v481
        %591 = vmatprep.subr.mxu0 %v484
        %592 = vmatpush1.msra.mxu0 %v483
        %593 = vmatprep.subr.mxu0 %v486
        %594 = vmatpush1.msra.mxu0 %v485
        %595 = vmatprep.subr.mxu0 %v488
        %596 = vmatpush1.msra.mxu0 %v487
        %597 = vmatprep.subr.mxu0 %v490
        %598 = vmatpush1.msra.mxu0 %v489
        %599 = vmatprep.subr.mxu0 %v492
        %600 = vmatpush1.msra.mxu0 %v491
        %601 = vmatprep.subr.mxu0 %v494
        %602 = vmatpush1.msra.mxu0 %v493
        %603 = vmatprep.subr.mxu0 %v496
        %604 = vmatpush1.msra.mxu0 %v495
        %605 = vmatprep.subr.mxu0 %v498
        %606 = vmatpush1.msra.mxu0 %v497
        %607 = vmatprep.subr.mxu0 %v500
        %608 = vmatpush1.msra.mxu0 %v499
        %609 = vmatprep.subr.mxu0 %v502
        %610 = vmatpush1.msra.mxu0 %v501
        %611 = vmatprep.subr.mxu0 %v504
        %612 = vmatpush1.msra.mxu0 %v503
        %613 = vmatprep.subr.mxu0 %v506
        %614 = vmatpush1.msra.mxu0 %v505
        %615 = vmatprep.subr.mxu0 %v508
        %616 = vmatpush1.msra.mxu0 %v507
        %617 = vmatprep.subr.mxu0 %v510
        %618 = vmatpush1.msra.mxu0 %v509
        %619 = vmatprep.subr.mxu0 %v512
        %620 = vmatpush1.msra.mxu0 %v511
        %621 = vmatprep.subr.mxu0 %v514
        %622 = vmatpush1.msra.mxu0 %v513
        %623 = vmatprep.subr.mxu0 %v516
        %624 = vmatpush1.msra.mxu0 %v515
        %625 = vmatprep.subr.mxu0 %v518
        %626 = vmatpush1.msra.mxu0 %v517
        %627 = vmatprep.subr.mxu0 %v520
        %628 = vmatpush1.msra.mxu0 %v519
        %629 = vmatprep.subr.mxu0 %v522
        %630 = vmatpush1.msra.mxu0 %v521
        %631 = vmatprep.subr.mxu0 %v524
        %632 = vmatpush1.msra.mxu0 %v523
        %633 = vmatprep.subr.mxu0 %v526
        %634 = vmatpush1.msra.mxu0 %v525
        %635 = vmatprep.subr.mxu0 %v528
        %636 = vmatpush1.msra.mxu0 %v527
        %637 = vmatprep.mubr.f32.mxu0 %v442
        %638 = vmatmul.mubr.f32.gmra.mrb[0].mxu0 %v441
        %v639 = vpop.f32.mrb[0].mxu0
        %v640 = vadd.f32 %v566, %v639
        %v641 = vpop.f32.mrb[0].mxu0
        %v642 = vadd.f32 %v570, %v641
        %643 = vmatprep.mubr.f32.mxu0 %v445
        %644 = vmatmul.mubr.f32.gmra.mrb[0].mxu0 %v444
        %v645 = vpop.f32.mrb[0].mxu0
        %v646 = vadd.f32 %v566, %v645
        %v647 = vpop.f32.mrb[0].mxu0
        %v648 = vadd.f32 %v570, %v647
        %649 = vmatprep.mubr.f32.mxu0 %v448
        %650 = vmatmul.mubr.f32.gmra.mrb[0].mxu0 %v447
        %v651 = vpop.f32.mrb[0].mxu0
        %v652 = vadd.f32 %v566, %v651
        %v653 = vpop.f32.mrb[0].mxu0
        %v654 = vadd.f32 %v570, %v653
        %655 = vmatprep.mubr.f32.mxu0 %v451
        %656 = vmatmul.mubr.f32.gmra.mrb[0].mxu0 %v450
        %v657 = vpop.f32.mrb[0].mxu0
        %v658 = vadd.f32 %v566, %v657
        %v659 = vpop.f32.mrb[0].mxu0
        %v660 = vadd.f32 %v570, %v659
        %661 = vmatprep.mubr.f32.mxu0 %v454
        %662 = vmatmul.mubr.f32.gmra.mrb[0].mxu0 %v453
        %v663 = vpop.f32.mrb[0].mxu0
        %v664 = vadd.f32 %v566, %v663
        %v665 = vpop.f32.mrb[0].mxu0
        %v666 = vadd.f32 %v570, %v665
        %667 = vmatprep.mubr.f32.mxu0 %v457
        %668 = vmatmul.mubr.f32.gmra.mrb[0].mxu0 %v456
        %v669 = vpop.f32.mrb[0].mxu0
        %v670 = vadd.f32 %v566, %v669
        %v671 = vpop.f32.mrb[0].mxu0
        %v672 = vadd.f32 %v570, %v671
        %673 = vmatprep.mubr.f32.mxu0 %v460
        %674 = vmatmul.mubr.f32.gmra.mrb[0].mxu0 %v459
        %v675 = vpop.f32.mrb[0].mxu0
        %v676 = vadd.f32 %v566, %v675
        %v677 = vpop.f32.mrb[0].mxu0
        %v678 = vadd.f32 %v570, %v677
        %679 = vmatprep.mubr.f32.mxu0 %v463
        %680 = vmatmul.mubr.f32.gmra.mrb[0].mxu0 %v462
        %v681 = vpop.f32.mrb[0].mxu0
        %v682 = vadd.f32 %v566, %v681
        %v683 = vpop.f32.mrb[0].mxu0
        %v684 = vadd.f32 %v570, %v683
        %685 = vdwg.mxu0
        %686 = vmatprep.subr.mxu0 %v530
        %687 = vmatpush1.msra.mxu0 %v529
        %688 = vmatprep.subr.mxu0 %v532
        %689 = vmatpush1.msra.mxu0 %v531
        %690 = vmatprep.subr.mxu0 %v534
        %691 = vmatpush1.msra.mxu0 %v533
        %692 = vmatprep.subr.mxu0 %v536
        %693 = vmatpush1.msra.mxu0 %v535
        %694 = vmatprep.subr.mxu0 %v538
        %695 = vmatpush1.msra.mxu0 %v537
        %696 = vmatprep.subr.mxu0 %v540
        %697 = vmatpush1.msra.mxu0 %v539
        %698 = vmatprep.subr.mxu0 %v542
        %699 = vmatpush1.msra.mxu0 %v541
        %700 = vmatprep.subr.mxu0 %v544
        %701 = vmatpush1.msra.mxu0 %v543
        %702 = vmatprep.subr.mxu0 %v546
        %703 = vmatpush1.msra.mxu0 %v545
        %704 = vmatprep.subr.mxu0 %v548
        %705 = vmatpush1.msra.mxu0 %v547
        %706 = vmatprep.subr.mxu0 %v550
        %707 = vmatpush1.msra.mxu0 %v549
        %708 = vmatprep.subr.mxu0 %v552
        %709 = vmatpush1.msra.mxu0 %v551
        %710 = vmatprep.subr.mxu0 %v554
        %711 = vmatpush1.msra.mxu0 %v553
        %712 = vmatprep.subr.mxu0 %v556
        %713 = vmatpush1.msra.mxu0 %v555
        %714 = vmatprep.subr.mxu0 %v558
        %715 = vmatpush1.msra.mxu0 %v557
        %716 = vmatprep.subr.mxu0 %v560
        %717 = vmatpush1.msra.mxu0 %v559
        %718 = vmatprep.subr.mxu0 0.0
        %719 = vmatpush1.msra.mxu0 0.0
        %720 = vmatprep.subr.mxu0 0.0
        %721 = vmatpush1.msra.mxu0 0.0
        %722 = vmatprep.subr.mxu0 0.0
        %723 = vmatpush1.msra.mxu0 0.0
        %724 = vmatprep.subr.mxu0 0.0
        %725 = vmatpush1.msra.mxu0 0.0
        %726 = vmatprep.subr.mxu0 0.0
        %727 = vmatpush1.msra.mxu0 0.0
        %728 = vmatprep.subr.mxu0 0.0
        %729 = vmatpush1.msra.mxu0 0.0
        %730 = vmatprep.subr.mxu0 0.0
        %731 = vmatpush1.msra.mxu0 0.0
        %732 = vmatprep.subr.mxu0 0.0
        %733 = vmatpush1.msra.mxu0 0.0
        %734 = vmatprep.subr.mxu0 0.0
        %735 = vmatpush1.msra.mxu0 0.0
        %736 = vmatprep.subr.mxu0 0.0
        %737 = vmatpush1.msra.mxu0 0.0
        %738 = vmatprep.subr.mxu0 0.0
        %739 = vmatpush1.msra.mxu0 0.0
        %740 = vmatprep.subr.mxu0 0.0
        %741 = vmatpush1.msra.mxu0 0.0
        %742 = vmatprep.subr.mxu0 0.0
        %743 = vmatpush1.msra.mxu0 0.0
        %744 = vmatprep.subr.mxu0 0.0
        %745 = vmatpush1.msra.mxu0 0.0
        %746 = vmatprep.subr.mxu0 0.0
        %747 = vmatpush1.msra.mxu0 0.0
        %748 = vmatprep.subr.mxu0 0.0
        %749 = vmatpush1.msra.mxu0 0.0
        %750 = vmatprep.mubr.f32.mxu0 0.0
        %751 = vmatmul.mubr.f32.gmra.mrb[0].mxu0 %v443
        %v752 = vpop.f32.mrb[0].mxu0
        %v753 = vadd.f32 %v640, %v752
        %v754 = vpop.f32.mrb[0].mxu0
        %v755 = vadd.f32 %v642, %v754
        %756 = vmatprep.mubr.f32.mxu0 0.0
        %757 = vmatmul.mubr.f32.gmra.mrb[0].mxu0 %v446
        %v758 = vpop.f32.mrb[0].mxu0
        %v759 = vadd.f32 %v646, %v758
        %v760 = vpop.f32.mrb[0].mxu0
        %v761 = vadd.f32 %v648, %v760
        %762 = vmatprep.mubr.f32.mxu0 0.0
        %763 = vmatmul.mubr.f32.gmra.mrb[0].mxu0 %v449
        %v764 = vpop.f32.mrb[0].mxu0
        %v765 = vadd.f32 %v652, %v764
        %v766 = vpop.f32.mrb[0].mxu0
        %v767 = vadd.f32 %v654, %v766
        %768 = vmatprep.mubr.f32.mxu0 0.0
        %769 = vmatmul.mubr.f32.gmra.mrb[0].mxu0 %v452
        %v770 = vpop.f32.mrb[0].mxu0
        %v771 = vadd.f32 %v658, %v770
        %v772 = vpop.f32.mrb[0].mxu0
        %v773 = vadd.f32 %v660, %v772
        %774 = vmatprep.mubr.f32.mxu0 0.0
        %775 = vmatmul.mubr.f32.gmra.mrb[0].mxu0 %v455
        %v776 = vpop.f32.mrb[0].mxu0
        %v777 = vadd.f32 %v664, %v776
        %v778 = vpop.f32.mrb[0].mxu0
        %v779 = vadd.f32 %v666, %v778
        %780 = vmatprep.mubr.f32.mxu0 0.0
        %781 = vmatmul.mubr.f32.gmra.mrb[0].mxu0 %v458
        %v782 = vpop.f32.mrb[0].mxu0
        %v783 = vadd.f32 %v670, %v782
        %v784 = vpop.f32.mrb[0].mxu0
        %v785 = vadd.f32 %v672, %v784
        %786 = vmatprep.mubr.f32.mxu0 0.0
        %787 = vmatmul.mubr.f32.gmra.mrb[0].mxu0 %v461
        %v788 = vpop.f32.mrb[0].mxu0
        %v789 = vadd.f32 %v676, %v788
        %v790 = vpop.f32.mrb[0].mxu0
        %v791 = vadd.f32 %v678, %v790
        %792 = vmatprep.mubr.f32.mxu0 0.0
        %793 = vmatmul.mubr.f32.gmra.mrb[0].mxu0 %v464
        %v794 = vpop.f32.mrb[0].mxu0
        %v795 = vadd.f32 %v682, %v794
        %v796 = vpop.f32.mrb[0].mxu0
        %v797 = vadd.f32 %v684, %v796
        %798 = vdwg.mxu0
        %v799 = vmax.f32 %v753, 0.0
        %v800 = vmax.f32 %v755, 0.0
        %v801 = vmax.f32 %v759, 0.0
        %v802 = vmax.f32 %v761, 0.0
        %v803 = vmax.f32 %v765, 0.0
        %v804 = vmax.f32 %v767, 0.0
        %v805 = vmax.f32 %v771, 0.0
        %v806 = vmax.f32 %v773, 0.0
        %v807 = vmax.f32 %v777, 0.0
        %v808 = vmax.f32 %v779, 0.0
        %v809 = vmax.f32 %v783, 0.0
        %v810 = vmax.f32 %v785, 0.0
        %v811 = vmax.f32 %v789, 0.0
        %v812 = vmax.f32 %v791, 0.0
        %v813 = vmax.f32 %v795, 0.0
        %v814 = vmax.f32 %v797, 0.0
        %815 = vst [vmem:[%s425] sm:$0xff] %v799
        %816 = vst [vmem:[%s425 + $0x8] sm:$0xff] %v800
        %817 = vst [vmem:[%s425 + $0x10] sm:$0xff] %v801
        %818 = vst [vmem:[%s425 + $0x18] sm:$0xff] %v802
        %819 = vst [vmem:[%s425 + $0x20] sm:$0xff] %v803
        %820 = vst [vmem:[%s425 + $0x28] sm:$0xff] %v804
        %821 = vst [vmem:[%s425 + $0x30] sm:$0xff] %v805
        %822 = vst [vmem:[%s425 + $0x38] sm:$0xff] %v806
        %823 = vst [vmem:[%s425 + $0x40] sm:$0xff] %v807
        %824 = vst [vmem:[%s425 + $0x48] sm:$0xff] %v808
        %825 = vst [vmem:[%s425 + $0x50] sm:$0xff] %v809
        %826 = vst [vmem:[%s425 + $0x58] sm:$0xff] %v810
        %827 = vst [vmem:[%s425 + $0x60] sm:$0xff] %v811
        %828 = vst [vmem:[%s425 + $0x68] sm:$0xff] %v812
        %829 = vst [vmem:[%s425 + $0x70] sm:$0xff] %v813
        %830 = vst [vmem:[%s425 + $0x78] sm:$0xff] %v814
        %v831 = vld [vmem:[#allocation8] sm:$0xff]
        %v832 = vld [vmem:[#allocation8 + $0x8] sm:$0xff]
        %v833 = vld [vmem:[#allocation8 + $0x10] sm:$0xff]
        %v834 = vld [vmem:[#allocation8 + $0x18] sm:$0xff]
        %v835 = vld [vmem:[#allocation8 + $0x20] sm:$0xff]
        %v836 = vld [vmem:[#allocation8 + $0x28] sm:$0xff]
        %v837 = vld [vmem:[#allocation8 + $0x30] sm:$0xff]
        %v838 = vld [vmem:[#allocation8 + $0x38] sm:$0xff]
        %v839 = vld [vmem:[#allocation8 + $0x40] sm:$0xff]
        %v840 = vld [vmem:[#allocation8 + $0x48] sm:$0xff]
        %v841 = vld [vmem:[#allocation8 + $0x50] sm:$0xff]
        %v842 = vld [vmem:[#allocation8 + $0x58] sm:$0xff]
        %v843 = vld [vmem:[#allocation8 + $0x60] sm:$0xff]
        %v844 = vld [vmem:[#allocation8 + $0x68] sm:$0xff]
        %v845 = vld [vmem:[#allocation8 + $0x70] sm:$0xff]
        %v846 = vld [vmem:[#allocation8 + $0x78] sm:$0xff]
        %v847 = vld [vmem:[#allocation8 + $0x80] sm:$0xff]
        %v848 = vld [vmem:[#allocation8 + $0x88] sm:$0xff]
        %v849 = vld [vmem:[#allocation8 + $0x90] sm:$0xff]
        %v850 = vld [vmem:[#allocation8 + $0x98] sm:$0xff]
        %v851 = vld [vmem:[#allocation8 + $0xa0] sm:$0xff]
        %v852 = vld [vmem:[#allocation8 + $0xa8] sm:$0xff]
        %v853 = vld [vmem:[#allocation8 + $0xb0] sm:$0xff]
        %v854 = vld [vmem:[#allocation8 + $0xb8] sm:$0xff]
        %v855 = vld [vmem:[#allocation8 + $0xc0] sm:$0xff]
        %v856 = vld [vmem:[#allocation8 + $0xc8] sm:$0xff]
        %v857 = vld [vmem:[#allocation8 + $0xd0] sm:$0xff]
        %v858 = vld [vmem:[#allocation8 + $0xd8] sm:$0xff]
        %v859 = vld [vmem:[#allocation8 + $0xe0] sm:$0xff]
        %v860 = vld [vmem:[#allocation8 + $0xe8] sm:$0xff]
        %v861 = vld [vmem:[#allocation8 + $0xf0] sm:$0xff]
        %v862 = vld [vmem:[#allocation8 + $0xf8] sm:$0xff]
        %v863 = vld [vmem:[%s4] sm:$0x1]
        %v865 = vlaneseq
        %v866 = vshrl.u32 %v865, 7
        %v867 = vsub.s32 0, %v866
        %v868 = vrot.slane %v863, %v867
        %870 = vmatprep.subr.mxu0 0.0
        %871 = vmatpush1.msra.mxu0 %v831
        %872 = vmatprep.subr.mxu0 0.0
        %873 = vmatpush1.msra.mxu0 %v832
        %874 = vmatprep.subr.mxu0 0.0
        %875 = vmatpush1.msra.mxu0 %v833
        %876 = vmatprep.subr.mxu0 0.0
        %877 = vmatpush1.msra.mxu0 %v834
        %878 = vmatprep.subr.mxu0 0.0
        %879 = vmatpush1.msra.mxu0 %v835
        %880 = vmatprep.subr.mxu0 0.0
        %881 = vmatpush1.msra.mxu0 %v836
        %882 = vmatprep.subr.mxu0 0.0
        %883 = vmatpush1.msra.mxu0 %v837
        %884 = vmatprep.subr.mxu0 0.0
        %885 = vmatpush1.msra.mxu0 %v838
        %886 = vmatprep.subr.mxu0 0.0
        %887 = vmatpush1.msra.mxu0 %v839
        %888 = vmatprep.subr.mxu0 0.0
        %889 = vmatpush1.msra.mxu0 %v840
        %890 = vmatprep.subr.mxu0 0.0
        %891 = vmatpush1.msra.mxu0 %v841
        %892 = vmatprep.subr.mxu0 0.0
        %893 = vmatpush1.msra.mxu0 %v842
        %894 = vmatprep.subr.mxu0 0.0
        %895 = vmatpush1.msra.mxu0 %v843
        %896 = vmatprep.subr.mxu0 0.0
        %897 = vmatpush1.msra.mxu0 %v844
        %898 = vmatprep.subr.mxu0 0.0
        %899 = vmatpush1.msra.mxu0 %v845
        %900 = vmatprep.subr.mxu0 0.0
        %901 = vmatpush1.msra.mxu0 %v846
        %902 = vmatprep.subr.mxu0 0.0
        %903 = vmatpush1.msra.mxu0 %v847
        %904 = vmatprep.subr.mxu0 0.0
        %905 = vmatpush1.msra.mxu0 %v848
        %906 = vmatprep.subr.mxu0 0.0
        %907 = vmatpush1.msra.mxu0 %v849
        %908 = vmatprep.subr.mxu0 0.0
        %909 = vmatpush1.msra.mxu0 %v850
        %910 = vmatprep.subr.mxu0 0.0
        %911 = vmatpush1.msra.mxu0 %v851
        %912 = vmatprep.subr.mxu0 0.0
        %913 = vmatpush1.msra.mxu0 %v852
        %914 = vmatprep.subr.mxu0 0.0
        %915 = vmatpush1.msra.mxu0 %v853
        %916 = vmatprep.subr.mxu0 0.0
        %917 = vmatpush1.msra.mxu0 %v854
        %918 = vmatprep.subr.mxu0 0.0
        %919 = vmatpush1.msra.mxu0 %v855
        %920 = vmatprep.subr.mxu0 0.0
        %921 = vmatpush1.msra.mxu0 %v856
        %922 = vmatprep.subr.mxu0 0.0
        %923 = vmatpush1.msra.mxu0 %v857
        %924 = vmatprep.subr.mxu0 0.0
        %925 = vmatpush1.msra.mxu0 %v858
        %926 = vmatprep.subr.mxu0 0.0
        %927 = vmatpush1.msra.mxu0 %v859
        %928 = vmatprep.subr.mxu0 0.0
        %929 = vmatpush1.msra.mxu0 %v860
        %930 = vmatprep.subr.mxu0 0.0
        %931 = vmatpush1.msra.mxu0 %v861
        %932 = vmatprep.subr.mxu0 0.0
        %933 = vmatpush1.msra.mxu0 %v862
        %934 = vmatprep.mubr.f32.mxu0 %v800
        %935 = vmatmul.mubr.f32.gmra.mrb[0].mxu0 %v799
        %v936 = vpop.f32.mrb[0].mxu0
        %v937 = vadd.f32 %v868, %v936
        %v938 = vpop.f32.mrb[0].mxu0
        %939 = vmatprep.mubr.f32.mxu0 %v802
        %940 = vmatmul.mubr.f32.gmra.mrb[0].mxu0 %v801
        %v941 = vpop.f32.mrb[0].mxu0
        %v942 = vadd.f32 %v868, %v941
        %v943 = vpop.f32.mrb[0].mxu0
        %944 = vmatprep.mubr.f32.mxu0 %v804
        %945 = vmatmul.mubr.f32.gmra.mrb[0].mxu0 %v803
        %v946 = vpop.f32.mrb[0].mxu0
        %v947 = vadd.f32 %v868, %v946
        %v948 = vpop.f32.mrb[0].mxu0
        %949 = vmatprep.mubr.f32.mxu0 %v806
        %950 = vmatmul.mubr.f32.gmra.mrb[0].mxu0 %v805
        %v951 = vpop.f32.mrb[0].mxu0
        %v952 = vadd.f32 %v868, %v951
        %v953 = vpop.f32.mrb[0].mxu0
        %954 = vmatprep.mubr.f32.mxu0 %v808
        %955 = vmatmul.mubr.f32.gmra.mrb[0].mxu0 %v807
        %v956 = vpop.f32.mrb[0].mxu0
        %v957 = vadd.f32 %v868, %v956
        %v958 = vpop.f32.mrb[0].mxu0
        %959 = vmatprep.mubr.f32.mxu0 %v810
        %960 = vmatmul.mubr.f32.gmra.mrb[0].mxu0 %v809
        %v961 = vpop.f32.mrb[0].mxu0
        %v962 = vadd.f32 %v868, %v961
        %v963 = vpop.f32.mrb[0].mxu0
        %964 = vmatprep.mubr.f32.mxu0 %v812
        %965 = vmatmul.mubr.f32.gmra.mrb[0].mxu0 %v811
        %v966 = vpop.f32.mrb[0].mxu0
        %v967 = vadd.f32 %v868, %v966
        %v968 = vpop.f32.mrb[0].mxu0
        %969 = vmatprep.mubr.f32.mxu0 %v814
        %970 = vmatmul.mubr.f32.gmra.mrb[0].mxu0 %v813
        %v971 = vpop.f32.mrb[0].mxu0
        %v972 = vadd.f32 %v868, %v971
        %v973 = vpop.f32.mrb[0].mxu0
        %974 = vdwg.mxu0
        %v975 = vld [vmem:[#allocation9] sm:$0xff]
        %v976 = vld [vmem:[#allocation9 + $0x8] sm:$0xff]
        %v977 = vld [vmem:[#allocation9 + $0x10] sm:$0xff]
        %v978 = vld [vmem:[#allocation9 + $0x18] sm:$0xff]
        %v979 = vld [vmem:[#allocation9 + $0x20] sm:$0xff]
        %v980 = vld [vmem:[#allocation9 + $0x28] sm:$0xff]
        %v981 = vld [vmem:[#allocation9 + $0x30] sm:$0xff]
        %v982 = vld [vmem:[#allocation9 + $0x38] sm:$0xff]
        %v983 = vld [vmem:[#allocation9 + $0x40] sm:$0xff]
        %v984 = vld [vmem:[#allocation9 + $0x48] sm:$0xff]
        %v985 = vld [vmem:[#allocation9 + $0x50] sm:$0xff]
        %v986 = vld [vmem:[#allocation9 + $0x58] sm:$0xff]
        %v987 = vld [vmem:[#allocation9 + $0x60] sm:$0xff]
        %v988 = vld [vmem:[#allocation9 + $0x68] sm:$0xff]
        %v989 = vld [vmem:[#allocation9 + $0x70] sm:$0xff]
        %v990 = vld [vmem:[#allocation9 + $0x78] sm:$0xff]
        %v991 = vld [vmem:[#allocation9 + $0x80] sm:$0xff]
        %v992 = vld [vmem:[#allocation9 + $0x88] sm:$0xff]
        %v993 = vld [vmem:[#allocation9 + $0x90] sm:$0xff]
        %v994 = vld [vmem:[#allocation9 + $0x98] sm:$0xff]
        %v995 = vld [vmem:[#allocation9 + $0xa0] sm:$0xff]
        %v996 = vld [vmem:[#allocation9 + $0xa8] sm:$0xff]
        %v997 = vld [vmem:[#allocation9 + $0xb0] sm:$0xff]
        %v998 = vld [vmem:[#allocation9 + $0xb8] sm:$0xff]
        %v999 = vld [vmem:[#allocation9 + $0xc0] sm:$0xff]
        %v1000 = vld [vmem:[#allocation9 + $0xc8] sm:$0xff]
        %v1001 = vld [vmem:[#allocation9 + $0xd0] sm:$0xff]
        %v1002 = vld [vmem:[#allocation9 + $0xd8] sm:$0xff]
        %v1003 = vld [vmem:[#allocation9 + $0xe0] sm:$0xff]
        %v1004 = vld [vmem:[#allocation9 + $0xe8] sm:$0xff]
        %v1005 = vld [vmem:[#allocation9 + $0xf0] sm:$0xff]
        %v1006 = vld [vmem:[#allocation9 + $0xf8] sm:$0xff]
        %v1007 = vld [vmem:[%s6] sm:$0x1]
        %v1009 = vlaneseq
        %v1010 = vshrl.u32 %v1009, 7
        %v1011 = vsub.s32 0, %v1010
        %v1012 = vrot.slane %v1007, %v1011
        %1014 = vmatprep.subr.mxu0 0.0
        %1015 = vmatpush1.msra.mxu0 %v975
        %1016 = vmatprep.subr.mxu0 0.0
        %1017 = vmatpush1.msra.mxu0 %v976
        %1018 = vmatprep.subr.mxu0 0.0
        %1019 = vmatpush1.msra.mxu0 %v977
        %1020 = vmatprep.subr.mxu0 0.0
        %1021 = vmatpush1.msra.mxu0 %v978
        %1022 = vmatprep.subr.mxu0 0.0
        %1023 = vmatpush1.msra.mxu0 %v979
        %1024 = vmatprep.subr.mxu0 0.0
        %1025 = vmatpush1.msra.mxu0 %v980
        %1026 = vmatprep.subr.mxu0 0.0
        %1027 = vmatpush1.msra.mxu0 %v981
        %1028 = vmatprep.subr.mxu0 0.0
        %1029 = vmatpush1.msra.mxu0 %v982
        %1030 = vmatprep.subr.mxu0 0.0
        %1031 = vmatpush1.msra.mxu0 %v983
        %1032 = vmatprep.subr.mxu0 0.0
        %1033 = vmatpush1.msra.mxu0 %v984
        %1034 = vmatprep.subr.mxu0 0.0
        %1035 = vmatpush1.msra.mxu0 %v985
        %1036 = vmatprep.subr.mxu0 0.0
        %1037 = vmatpush1.msra.mxu0 %v986
        %1038 = vmatprep.subr.mxu0 0.0
        %1039 = vmatpush1.msra.mxu0 %v987
        %1040 = vmatprep.subr.mxu0 0.0
        %1041 = vmatpush1.msra.mxu0 %v988
        %1042 = vmatprep.subr.mxu0 0.0
        %1043 = vmatpush1.msra.mxu0 %v989
        %1044 = vmatprep.subr.mxu0 0.0
        %1045 = vmatpush1.msra.mxu0 %v990
        %1046 = vmatprep.subr.mxu0 0.0
        %1047 = vmatpush1.msra.mxu0 %v991
        %1048 = vmatprep.subr.mxu0 0.0
        %1049 = vmatpush1.msra.mxu0 %v992
        %1050 = vmatprep.subr.mxu0 0.0
        %1051 = vmatpush1.msra.mxu0 %v993
        %1052 = vmatprep.subr.mxu0 0.0
        %1053 = vmatpush1.msra.mxu0 %v994
        %1054 = vmatprep.subr.mxu0 0.0
        %1055 = vmatpush1.msra.mxu0 %v995
        %1056 = vmatprep.subr.mxu0 0.0
        %1057 = vmatpush1.msra.mxu0 %v996
        %1058 = vmatprep.subr.mxu0 0.0
        %1059 = vmatpush1.msra.mxu0 %v997
        %1060 = vmatprep.subr.mxu0 0.0
        %1061 = vmatpush1.msra.mxu0 %v998
        %1062 = vmatprep.subr.mxu0 0.0
        %1063 = vmatpush1.msra.mxu0 %v999
        %1064 = vmatprep.subr.mxu0 0.0
        %1065 = vmatpush1.msra.mxu0 %v1000
        %1066 = vmatprep.subr.mxu0 0.0
        %1067 = vmatpush1.msra.mxu0 %v1001
        %1068 = vmatprep.subr.mxu0 0.0
        %1069 = vmatpush1.msra.mxu0 %v1002
        %1070 = vmatprep.subr.mxu0 0.0
        %1071 = vmatpush1.msra.mxu0 %v1003
        %1072 = vmatprep.subr.mxu0 0.0
        %1073 = vmatpush1.msra.mxu0 %v1004
        %1074 = vmatprep.subr.mxu0 0.0
        %1075 = vmatpush1.msra.mxu0 %v1005
        %1076 = vmatprep.subr.mxu0 0.0
        %1077 = vmatpush1.msra.mxu0 %v1006
        %1078 = vmatprep.mubr.f32.mxu0 %v800
        %1079 = vmatmul.mubr.f32.gmra.mrb[0].mxu0 %v799
        %v1080 = vpop.f32.mrb[0].mxu0
        %v1081 = vadd.f32 %v1012, %v1080
        %v1082 = vpop.f32.mrb[0].mxu0
        %1083 = vmatprep.mubr.f32.mxu0 %v802
        %1084 = vmatmul.mubr.f32.gmra.mrb[0].mxu0 %v801
        %v1085 = vpop.f32.mrb[0].mxu0
        %v1086 = vadd.f32 %v1012, %v1085
        %v1087 = vpop.f32.mrb[0].mxu0
        %1088 = vmatprep.mubr.f32.mxu0 %v804
        %1089 = vmatmul.mubr.f32.gmra.mrb[0].mxu0 %v803
        %v1090 = vpop.f32.mrb[0].mxu0
        %v1091 = vadd.f32 %v1012, %v1090
        %v1092 = vpop.f32.mrb[0].mxu0
        %1093 = vmatprep.mubr.f32.mxu0 %v806
        %1094 = vmatmul.mubr.f32.gmra.mrb[0].mxu0 %v805
        %v1095 = vpop.f32.mrb[0].mxu0
        %v1096 = vadd.f32 %v1012, %v1095
        %v1097 = vpop.f32.mrb[0].mxu0
        %1098 = vmatprep.mubr.f32.mxu0 %v808
        %1099 = vmatmul.mubr.f32.gmra.mrb[0].mxu0 %v807
        %v1100 = vpop.f32.mrb[0].mxu0
        %v1101 = vadd.f32 %v1012, %v1100
        %v1102 = vpop.f32.mrb[0].mxu0
        %1103 = vmatprep.mubr.f32.mxu0 %v810
        %1104 = vmatmul.mubr.f32.gmra.mrb[0].mxu0 %v809
        %v1105 = vpop.f32.mrb[0].mxu0
        %v1106 = vadd.f32 %v1012, %v1105
        %v1107 = vpop.f32.mrb[0].mxu0
        %1108 = vmatprep.mubr.f32.mxu0 %v812
        %1109 = vmatmul.mubr.f32.gmra.mrb[0].mxu0 %v811
        %v1110 = vpop.f32.mrb[0].mxu0
        %v1111 = vadd.f32 %v1012, %v1110
        %v1112 = vpop.f32.mrb[0].mxu0
        %1113 = vmatprep.mubr.f32.mxu0 %v814
        %1114 = vmatmul.mubr.f32.gmra.mrb[0].mxu0 %v813
        %v1115 = vpop.f32.mrb[0].mxu0
        %v1116 = vadd.f32 %v1012, %v1115
        %v1117 = vpop.f32.mrb[0].mxu0
        %1118 = vdwg.mxu0
        %v1119 = vtanh.pop %v937
        %v1120 = vtanh.pop %v942
        %v1121 = vtanh.pop %v947
        %v1122 = vtanh.pop %v952
        %v1123 = vtanh.pop %v957
        %v1124 = vtanh.pop %v962
        %v1125 = vtanh.pop %v967
        %v1126 = vtanh.pop %v972
        %v1127 = vsub.f32 0.0, %v1081
        %v1128 = vsub.f32 0.0, %v1086
        %v1129 = vsub.f32 0.0, %v1091
        %v1130 = vsub.f32 0.0, %v1096
        %v1131 = vsub.f32 0.0, %v1101
        %v1132 = vsub.f32 0.0, %v1106
        %v1133 = vsub.f32 0.0, %v1111
        %v1134 = vsub.f32 0.0, %v1116
        %v1135 = vmul.f32 %v1127, 1.442695
        %v1136 = vpow.pop %v1135
        %v1137 = vmul.f32 %v1128, 1.442695
        %v1138 = vpow.pop %v1137
        %v1139 = vmul.f32 %v1129, 1.442695
        %v1140 = vpow.pop %v1139
        %v1141 = vmul.f32 %v1130, 1.442695
        %v1142 = vpow.pop %v1141
        %v1143 = vmul.f32 %v1131, 1.442695
        %v1144 = vpow.pop %v1143
        %v1145 = vmul.f32 %v1132, 1.442695
        %v1146 = vpow.pop %v1145
        %v1147 = vmul.f32 %v1133, 1.442695
        %v1148 = vpow.pop %v1147
        %v1149 = vmul.f32 %v1134, 1.442695
        %v1150 = vpow.pop %v1149
        %v1151 = vadd.f32 %v1136, 1.0
        %v1152 = vadd.f32 %v1138, 1.0
        %v1153 = vadd.f32 %v1140, 1.0
        %v1154 = vadd.f32 %v1142, 1.0
        %v1155 = vadd.f32 %v1144, 1.0
        %v1156 = vadd.f32 %v1146, 1.0
        %v1157 = vadd.f32 %v1148, 1.0
        %v1158 = vadd.f32 %v1150, 1.0
        %v1159 = vrcp.pop %v1151
        %v1160 = vmul.f32 1.0, %v1159
        %v1161 = vrcp.pop %v1152
        %v1162 = vmul.f32 1.0, %v1161
        %v1163 = vrcp.pop %v1153
        %v1164 = vmul.f32 1.0, %v1163
        %v1165 = vrcp.pop %v1154
        %v1166 = vmul.f32 1.0, %v1165
        %v1167 = vrcp.pop %v1155
        %v1168 = vmul.f32 1.0, %v1167
        %v1169 = vrcp.pop %v1156
        %v1170 = vmul.f32 1.0, %v1169
        %v1171 = vrcp.pop %v1157
        %v1172 = vmul.f32 1.0, %v1171
        %v1173 = vrcp.pop %v1158
        %v1174 = vmul.f32 1.0, %v1173
        %v1175 = vmul.f32 %v1119, %v1160
        %v1176 = vmul.f32 %v1120, %v1162
        %v1177 = vmul.f32 %v1121, %v1164
        %v1178 = vmul.f32 %v1122, %v1166
        %v1179 = vmul.f32 %v1123, %v1168
        %v1180 = vmul.f32 %v1124, %v1170
        %v1181 = vmul.f32 %v1125, %v1172
        %v1182 = vmul.f32 %v1126, %v1174
        %v1183 = vld [vmem:[%s7] sm:$0xff]
        %v1184 = vld [vmem:[%s7 + $0x8] sm:$0xff]
        %v1185 = vld [vmem:[%s7 + $0x10] sm:$0xff]
        %v1186 = vld [vmem:[%s7 + $0x18] sm:$0xff]
        %v1187 = vld [vmem:[%s7 + $0x20] sm:$0xff]
        %v1188 = vld [vmem:[%s7 + $0x28] sm:$0xff]
        %v1189 = vld [vmem:[%s7 + $0x30] sm:$0xff]
        %v1190 = vld [vmem:[%s7 + $0x38] sm:$0xff]
        %v1191 = vld [vmem:[%s7 + $0x40] sm:$0xff]
        %v1192 = vld [vmem:[%s7 + $0x48] sm:$0xff]
        %v1193 = vld [vmem:[%s7 + $0x50] sm:$0xff]
        %v1194 = vld [vmem:[%s7 + $0x58] sm:$0xff]
        %v1195 = vld [vmem:[%s7 + $0x60] sm:$0xff]
        %v1196 = vld [vmem:[%s7 + $0x68] sm:$0xff]
        %v1197 = vld [vmem:[%s7 + $0x70] sm:$0xff]
        %v1198 = vld [vmem:[%s7 + $0x78] sm:$0xff]
        %v1199 = vld [vmem:[#allocation2] sm:$0x1]
        %v1201 = vlaneseq
        %v1202 = vshrl.u32 %v1201, 7
        %v1203 = vsub.s32 0, %v1202
        %v1204 = vrot.slane %v1199, %v1203
        %1206 = vmatprep.subr.mxu0 0.0
        %1207 = vmatpush1.msra.mxu0 %v1183
        %1208 = vmatprep.subr.mxu0 0.0
        %1209 = vmatpush1.msra.mxu0 %v1184
        %1210 = vmatprep.subr.mxu0 0.0
        %1211 = vmatpush1.msra.mxu0 %v1185
        %1212 = vmatprep.subr.mxu0 0.0
        %1213 = vmatpush1.msra.mxu0 %v1186
        %1214 = vmatprep.subr.mxu0 0.0
        %1215 = vmatpush1.msra.mxu0 %v1187
        %1216 = vmatprep.subr.mxu0 0.0
        %1217 = vmatpush1.msra.mxu0 %v1188
        %1218 = vmatprep.subr.mxu0 0.0
        %1219 = vmatpush1.msra.mxu0 %v1189
        %1220 = vmatprep.subr.mxu0 0.0
        %1221 = vmatpush1.msra.mxu0 %v1190
        %1222 = vmatprep.subr.mxu0 0.0
        %1223 = vmatpush1.msra.mxu0 %v1191
        %1224 = vmatprep.subr.mxu0 0.0
        %1225 = vmatpush1.msra.mxu0 %v1192
        %1226 = vmatprep.subr.mxu0 0.0
        %1227 = vmatpush1.msra.mxu0 %v1193
        %1228 = vmatprep.subr.mxu0 0.0
        %1229 = vmatpush1.msra.mxu0 %v1194
        %1230 = vmatprep.subr.mxu0 0.0
        %1231 = vmatpush1.msra.mxu0 %v1195
        %1232 = vmatprep.subr.mxu0 0.0
        %1233 = vmatpush1.msra.mxu0 %v1196
        %1234 = vmatprep.subr.mxu0 0.0
        %1235 = vmatpush1.msra.mxu0 %v1197
        %1236 = vmatprep.subr.mxu0 0.0
        %1237 = vmatpush1.msra.mxu0 %v1198
        %1238 = vmatprep.subr.mxu0 0.0
        %1239 = vmatpush1.msra.mxu0 0.0
        %1240 = vmatprep.subr.mxu0 0.0
        %1241 = vmatpush1.msra.mxu0 0.0
        %1242 = vmatprep.subr.mxu0 0.0
        %1243 = vmatpush1.msra.mxu0 0.0
        %1244 = vmatprep.subr.mxu0 0.0
        %1245 = vmatpush1.msra.mxu0 0.0
        %1246 = vmatprep.subr.mxu0 0.0
        %1247 = vmatpush1.msra.mxu0 0.0
        %1248 = vmatprep.subr.mxu0 0.0
        %1249 = vmatpush1.msra.mxu0 0.0
        %1250 = vmatprep.subr.mxu0 0.0
        %1251 = vmatpush1.msra.mxu0 0.0
        %1252 = vmatprep.subr.mxu0 0.0
        %1253 = vmatpush1.msra.mxu0 0.0
        %1254 = vmatprep.subr.mxu0 0.0
        %1255 = vmatpush1.msra.mxu0 0.0
        %1256 = vmatprep.subr.mxu0 0.0
        %1257 = vmatpush1.msra.mxu0 0.0
        %1258 = vmatprep.subr.mxu0 0.0
        %1259 = vmatpush1.msra.mxu0 0.0
        %1260 = vmatprep.subr.mxu0 0.0
        %1261 = vmatpush1.msra.mxu0 0.0
        %1262 = vmatprep.subr.mxu0 0.0
        %1263 = vmatpush1.msra.mxu0 0.0
        %1264 = vmatprep.subr.mxu0 0.0
        %1265 = vmatpush1.msra.mxu0 0.0
        %1266 = vmatprep.subr.mxu0 0.0
        %1267 = vmatpush1.msra.mxu0 0.0
        %1268 = vmatprep.subr.mxu0 0.0
        %1269 = vmatpush1.msra.mxu0 0.0
        %1270 = vmatprep.mubr.f32.mxu0 0.0
        %1271 = vmatmul.mubr.f32.gmra.mrb[0].mxu0 %v1175
        %v1272 = vpop.f32.mrb[0].mxu0
        %v1273 = vadd.f32 %v1204, %v1272
        %v1274 = vpop.f32.mrb[0].mxu0
        %1275 = vmatprep.mubr.f32.mxu0 0.0
        %1276 = vmatmul.mubr.f32.gmra.mrb[0].mxu0 %v1176
        %v1277 = vpop.f32.mrb[0].mxu0
        %v1278 = vadd.f32 %v1204, %v1277
        %v1279 = vpop.f32.mrb[0].mxu0
        %1280 = vmatprep.mubr.f32.mxu0 0.0
        %1281 = vmatmul.mubr.f32.gmra.mrb[0].mxu0 %v1177
        %v1282 = vpop.f32.mrb[0].mxu0
        %v1283 = vadd.f32 %v1204, %v1282
        %v1284 = vpop.f32.mrb[0].mxu0
        %1285 = vmatprep.mubr.f32.mxu0 0.0
        %1286 = vmatmul.mubr.f32.gmra.mrb[0].mxu0 %v1178
        %v1287 = vpop.f32.mrb[0].mxu0
        %v1288 = vadd.f32 %v1204, %v1287
        %v1289 = vpop.f32.mrb[0].mxu0
        %1290 = vmatprep.mubr.f32.mxu0 0.0
        %1291 = vmatmul.mubr.f32.gmra.mrb[0].mxu0 %v1179
        %v1292 = vpop.f32.mrb[0].mxu0
        %v1293 = vadd.f32 %v1204, %v1292
        %v1294 = vpop.f32.mrb[0].mxu0
        %1295 = vmatprep.mubr.f32.mxu0 0.0
        %1296 = vmatmul.mubr.f32.gmra.mrb[0].mxu0 %v1180
        %v1297 = vpop.f32.mrb[0].mxu0
        %v1298 = vadd.f32 %v1204, %v1297
        %v1299 = vpop.f32.mrb[0].mxu0
        %1300 = vmatprep.mubr.f32.mxu0 0.0
        %1301 = vmatmul.mubr.f32.gmra.mrb[0].mxu0 %v1181
        %v1302 = vpop.f32.mrb[0].mxu0
        %v1303 = vadd.f32 %v1204, %v1302
        %v1304 = vpop.f32.mrb[0].mxu0
        %1305 = vmatprep.mubr.f32.mxu0 0.0
        %1306 = vmatmul.mubr.f32.gmra.mrb[0].mxu0 %v1182
        %v1307 = vpop.f32.mrb[0].mxu0
        %v1308 = vadd.f32 %v1204, %v1307
        %v1309 = vpop.f32.mrb[0].mxu0
        %1310 = vdwg.mxu0
        %vm1311 = vcmask 7168
        %1312 = vst.msk [vmem:[%s439] sm:$0xff] %vm1311, %v1273
        %1313 = vst.msk [vmem:[%s439 + $0x8] sm:$0xff] %vm1311, %v1278
        %1314 = vst.msk [vmem:[%s439 + $0x10] sm:$0xff] %vm1311, %v1283
        %1315 = vst.msk [vmem:[%s439 + $0x18] sm:$0xff] %vm1311, %v1288
        %1316 = vst.msk [vmem:[%s439 + $0x20] sm:$0xff] %vm1311, %v1293
        %1317 = vst.msk [vmem:[%s439 + $0x28] sm:$0xff] %vm1311, %v1298
        %1318 = vst.msk [vmem:[%s439 + $0x30] sm:$0xff] %vm1311, %v1303
        %1319 = vst.msk [vmem:[%s439 + $0x38] sm:$0xff] %vm1311, %v1308
        %s1320 = sand.u32 %s234, 1
        %s1321 = scalar_lea.sflag [#allocation5], %s1320
        %s1322 = sand.u32 %s234, 1
        %s1323 = smul.addr %s1322, 128
        %s1324 = scalar_lea.vmem [#allocation11], %s1323
        %s1325 = smul.u32 8, %s32
        %p1326 = scmp.lt.s32.totalorder %s1325, 31
        %s1327 = scalar_select %p1326, %s1325, 31
        %s1328 = smul.addr %s1327, 8
        %s1329 = scalar_lea.vmem %s10, %s1328
        // Predicated region
        $region73: #{tpu_custom_call.1} parent=55 // pred_check
          %p1330 = pneg %p244
        $region74: #{tpu_custom_call.1} parent=55 // pred_check_branch
          %1332 = sbr.rel (%p1330) target = $region76
        $region75: #{tpu_custom_call.1} parent=55 // pred_region
          %s1333 = smul.u32 8, %s32
          %s1335 = ssub.s32 2048, 2048
          %1336 = vsyncadd %s1321, %s1335
          %s1337 = smul.addr %s1333, 2
          %s1338 = smul.addr %s1337, 128
          %s1339 = scalar_lea.hbm %s9, %s1338
          %s1340 = sshll.u32 %s1324, 4
          %s1341 = int_to_ptr.vmem [resolvable:$true] %s1340
          %1346 = dma.vmem_to_hbm [thread:$0]  %s1341, 2048, %s1339, %s1321, 256, 256, 16
        $region76: #{tpu_custom_call.1} parent=55 // pred_fallthru
          _
        // Predicated region
        $region77: #{tpu_custom_call.1} parent=55 // pred_check
          %p1347 = pneg %p270
        $region78: #{tpu_custom_call.1} parent=55 // pred_check_branch
          %1349 = sbr.rel (%p1347) target = $region80
        $region79: #{tpu_custom_call.1} parent=55 // pred_region
          %s1350 = smul.u32 8, %s32
        $region80: #{tpu_custom_call.1} parent=55 // pred_fallthru
          _
      $region56: #{tpu_custom_call.1} parent=5 // pred_fallthru
        _
      %p1351 = scmp.le.s32.totalorder 2, %s27
      // Predicated region
      $region81: #{tpu_custom_call.1} parent=5 // pred_check
        %p1352 = pneg %p1351
      $region82: #{tpu_custom_call.1} parent=5 // pred_check_branch
        %1354 = sbr.rel (%p1352) target = $region84
      $region83: #{tpu_custom_call.1} parent=5 // pred_region
        %s1355 = ssub.s32 %s27, 2
        // Predicated region
        $region85: #{tpu_custom_call.1} parent=83 // pred_check
          %p1356 = pneg %p250
        $region86: #{tpu_custom_call.1} parent=83 // pred_check_branch
          %1358 = sbr.rel (%p1356) target = $region88
        $region87: #{tpu_custom_call.1} parent=83 // pred_region
          %s1359 = sand.u32 %s235, 1
          %s1360 = scalar_lea.sflag [#allocation5], %s1359
          %s1361 = sand.u32 %s235, 1
          %s1362 = smul.addr %s1361, 128
          %s1363 = scalar_lea.vmem [#allocation11], %s1362
          %1364 = dma.done %s1360, 2048
        $region88: #{tpu_custom_call.1} parent=83 // pred_fallthru
          _
        // Predicated region
        $region89: #{tpu_custom_call.1} parent=83 // pred_check
          %p1365 = pneg %p276
        $region90: #{tpu_custom_call.1} parent=83 // pred_check_branch
          %1367 = sbr.rel (%p1365) target = $region92
        $region91: #{tpu_custom_call.1} parent=83 // pred_region
          %s1368 = smul.u32 8, %s33
          %p1369 = scmp.lt.s32.totalorder %s1368, 31
          %s1370 = scalar_select %p1369, %s1368, 31
          %s1371 = smul.addr %s1370, 8
          %s1372 = scalar_lea.vmem %s10, %s1371
        $region92: #{tpu_custom_call.1} parent=83 // pred_fallthru
          _
      $region84: #{tpu_custom_call.1} parent=5 // pred_fallthru
        _
    $region6: #{tpu_custom_call.1} parent=1 // loop_footer
      %s31 = sadd.s32 1, %s27
    $region7: #{tpu_custom_call.1} parent=1 // loop_footer_branch
      %26 = sbr.rel target = $region3
    $region8: #{tpu_custom_call.1} parent=1 // loop_exit
      _
    %1373 = vsyncpa [#allocation4], 1
    %s1374 = scalar_lea.sflag [#allocation4], 1
    %1375 = vsyncpa %s1374, 1
    %1376 = vsyncpa [#allocation7], 1
    %1377 = vsyncpa [#allocation10], 1
    %1378 = vsyncpa [#allocation5], 1
    %s1379 = scalar_lea.sflag [#allocation5], 1
    %1380 = vsyncpa %s1379, 1

</llo_original>
